<compile_context>
chip_gen: v5e
topology: v5e:2x2
jax: 0.10.0
libtpu: 0.0.40
codegen_flags: <defaults>
</compile_context>

<pallas_src>
import functools
import math

import jax
import jax.numpy as jnp
from jax.experimental import pallas as pl
from jax.experimental.pallas import tpu as pltpu


# Small synthetic "BERT" config (pretrained checkpoint cannot be loaded here).
VOCAB = 100
MAX_POS = 16
HIDDEN = 32
NUM_HEADS = 4
HEAD_DIM = HIDDEN // NUM_HEADS
INTERMEDIATE = 64
NUM_LAYERS = 2
OUTPUT_SIZE = 4
LN_EPS = 1e-12

# Weight-slab lane layout (each sub-block starts on a 128-lane boundary).
W_LANES = 512
WQKV_OFF, WO_OFF, W1_OFF, W2T_OFF = 0, 128, 256, 384   # per encoder layer row
WP_OFF, WF_OFF = 0, 128                                # pooler/fc row


# ----------------------------- kernel helpers ------------------------------ #

def _layernorm(x, g, b, eps):
    """LayerNorm over last axis; all math in f32."""
    mean = jnp.mean(x, axis=-1, keepdims=True)
    xc = x - mean
    var = jnp.mean(xc * xc, axis=-1, keepdims=True)
    return xc * jax.lax.rsqrt(var + eps) * g + b


# ------------------------------ fused kernel ------------------------------- #

def _fused_forward_kernel(emb_ref, wslab_ref, vh_ref, vqkv_ref, vi_ref, o_ref,
                          *, batch, seq, hidden, num_heads, head_dim,
                          intermediate, out_size, num_layers, eps):
    H = hidden
    scale = 1.0 / math.sqrt(head_dim)

    vh = vh_ref[...]        # [2 + 6*L + 2, H] f32  (LN params / H-wide biases)
    vqkv = vqkv_ref[...]    # [L, 3H] f32           (fused QKV biases)
    vi = vi_ref[...]        # [L, I]  f32           (FFN intermediate biases)

    # --- embedding LayerNorm (prologue) ---
    x = emb_ref[...].astype(jnp.float32)                        # [B*S, H]
    h = _layernorm(x, vh[0:1, :], vh[1:2, :], eps)

    # --- encoder layers (statically unrolled; residual stays in VMEM/vregs) ---
    for l in range(num_layers):
        wl = wslab_ref[l]                                       # [H, 512] bf16
        wqkv = wl[:, WQKV_OFF:WQKV_OFF + 3 * H]                 # [H, 3H]
        wo = wl[:, WO_OFF:WO_OFF + H]                           # [H, H]
        w1 = wl[:, W1_OFF:W1_OFF + intermediate]                # [H, I]
        w2t = wl[:, W2T_OFF:W2T_OFF + intermediate]             # [H, I] (= w2.T)

        h_bf = h.astype(jnp.bfloat16)
        # fused QKV projection: bf16 MXU operands, f32 accumulation + bias.
        qkv = jnp.dot(h_bf, wqkv, preferred_element_type=jnp.float32)
        qkv = qkv + vqkv[l:l + 1, :]                            # [B*S, 3H] f32

        # multi-head attention: static head loop, each head batched over B.
        ctx_heads = []
        for hh in range(num_heads):
            qo = hh * head_dim
            ko = H + hh * head_dim
            vo = 2 * H + hh * head_dim
            qh = qkv[:, qo:qo + head_dim].reshape(batch, seq, head_dim).astype(jnp.bfloat16)
            kh = qkv[:, ko:ko + head_dim].reshape(batch, seq, head_dim).astype(jnp.bfloat16)
            vv = qkv[:, vo:vo + head_dim].reshape(batch, seq, head_dim).astype(jnp.bfloat16)
            s = jnp.einsum('bqd,bkd->bqk', qh, kh,
                           preferred_element_type=jnp.float32) * scale    # [B,S,S]
            m = jnp.max(s, axis=-1, keepdims=True)
            p = jnp.exp(s - m)                                            # softmax in f32
            p = p * pl.reciprocal(jnp.sum(p, axis=-1, keepdims=True), approx=True)
            ch = jnp.einsum('bqk,bkd->bqd', p.astype(jnp.bfloat16), vv,
                            preferred_element_type=jnp.float32)           # [B,S,Dh]
            ctx_heads.append(ch.reshape(batch * seq, head_dim))
        ctx = jnp.concatenate(ctx_heads, axis=-1)                         # [B*S, H]

        base = 2 + 6 * l  # rows in vh: bo, ln1_g, ln1_b, b2, ln2_g, ln2_b
        attn = jnp.dot(ctx.astype(jnp.bfloat16), wo,
                       preferred_element_type=jnp.float32) + vh[base:base + 1, :]
        h1 = _layernorm(attn + h, vh[base + 1:base + 2, :], vh[base + 2:base + 3, :], eps)

        ff = jnp.dot(h1.astype(jnp.bfloat16), w1,
                     preferred_element_type=jnp.float32) + vi[l:l + 1, :]
        # TODO(synk): HF BERT uses exact erf-GELU; tanh approximation used (tiny drift).
        ff = jax.nn.gelu(ff, approximate=True)
        ff2 = jax.lax.dot_general(ff.astype(jnp.bfloat16), w2t,
                                  (((1,), (1,)), ((), ())),
                                  preferred_element_type=jnp.float32) + vh[base + 3:base + 4, :]
        h = _layernorm(ff2 + h1, vh[base + 4:base + 5, :], vh[base + 5:base + 6, :], eps)

    # --- BERT pooler (tanh on CLS) + final fc head (epilogue) ---
    cls = jnp.concatenate([h[b * seq:b * seq + 1, :] for b in range(batch)], axis=0)  # [B, H]
    wh = wslab_ref[num_layers]                                   # [H, 512] bf16
    wp = wh[:, WP_OFF:WP_OFF + H]                                # [H, H]
    wf = wh[:, WF_OFF:WF_OFF + out_size]                         # [H, O]
    prow = 2 + 6 * num_layers
    pooled = jnp.tanh(jnp.dot(cls.astype(jnp.bfloat16), wp,
                              preferred_element_type=jnp.float32) + vh[prow:prow + 1, :])
    out = jnp.dot(pooled.astype(jnp.bfloat16), wf,
                  preferred_element_type=jnp.float32) + vh[prow + 1:prow + 2, 0:out_size]
    o_ref[...] = out.astype(o_ref.dtype)


def pallas_transformer_forward(emb_flat, wslab, vh, vqkv, vi, *, batch, seq):
    """Single gridless pallas_call: whole-array VMEM blocks, one invocation."""
    kernel = functools.partial(
        _fused_forward_kernel,
        batch=batch, seq=seq, hidden=HIDDEN, num_heads=NUM_HEADS,
        head_dim=HEAD_DIM, intermediate=INTERMEDIATE, out_size=OUTPUT_SIZE,
        num_layers=NUM_LAYERS, eps=LN_EPS)
    vmem = pl.BlockSpec(memory_space=pltpu.MemorySpace.VMEM)
    return pl.pallas_call(
        kernel,
        out_shape=jax.ShapeDtypeStruct((batch, OUTPUT_SIZE), jnp.float32),
        in_specs=[vmem, vmem, vmem, vmem, vmem],
        out_specs=vmem,
    )(emb_flat, wslab, vh, vqkv, vi)


# ----------------------------- model definition ----------------------------- #

def init_params(key):
    def nrm(k, shape):
        return (0.02 * jax.random.normal(k, shape)).astype(jnp.float32)

    keys = jax.random.split(key, 8 + NUM_LAYERS * 16)
    ki = iter(keys)
    params = {
        "word_emb": nrm(next(ki), (VOCAB, HIDDEN)),
        "pos_emb": nrm(next(ki), (MAX_POS, HIDDEN)),
        "type_emb": nrm(next(ki), (2, HIDDEN)),
        "emb_ln_g": jnp.ones((HIDDEN,), jnp.float32),
        "emb_ln_b": jnp.zeros((HIDDEN,), jnp.float32),
        "pool_w": nrm(next(ki), (HIDDEN, HIDDEN)),
        "pool_b": jnp.zeros((HIDDEN,), jnp.float32),
        "fc_w": nrm(next(ki), (HIDDEN, OUTPUT_SIZE)),
        "fc_b": jnp.zeros((OUTPUT_SIZE,), jnp.float32),
        "layers": [],
    }
    for _ in range(NUM_LAYERS):
        layer = {
            "wq": nrm(next(ki), (HIDDEN, HIDDEN)), "bq": jnp.zeros((HIDDEN,), jnp.float32),
            "wk": nrm(next(ki), (HIDDEN, HIDDEN)), "bk": jnp.zeros((HIDDEN,), jnp.float32),
            "wv": nrm(next(ki), (HIDDEN, HIDDEN)), "bv": jnp.zeros((HIDDEN,), jnp.float32),
            "wo": nrm(next(ki), (HIDDEN, HIDDEN)), "bo": jnp.zeros((HIDDEN,), jnp.float32),
            "ln1_g": jnp.ones((HIDDEN,), jnp.float32), "ln1_b": jnp.zeros((HIDDEN,), jnp.float32),
            "w1": nrm(next(ki), (HIDDEN, INTERMEDIATE)), "b1": jnp.zeros((INTERMEDIATE,), jnp.float32),
            "w2": nrm(next(ki), (INTERMEDIATE, HIDDEN)), "b2": jnp.zeros((HIDDEN,), jnp.float32),
            "ln2_g": jnp.ones((HIDDEN,), jnp.float32), "ln2_b": jnp.zeros((HIDDEN,), jnp.float32),
        }
        params["layers"].append(layer)
    return params


def pack_params(params):
    """One-time wrapper-side packing (hoisted OUT of the jitted forward):
    bf16 weight slab with 128-lane-aligned sub-blocks + small f32 vector slabs."""
    H, I, O, L = HIDDEN, INTERMEDIATE, OUTPUT_SIZE, NUM_LAYERS
    assert 3 * H <= WO_OFF and I <= 128 and O <= 128 and W2T_OFF + I <= W_LANES

    wslab = jnp.zeros((L + 1, H, W_LANES), jnp.float32)
    for l, ly in enumerate(params["layers"]):
        wqkv = jnp.concatenate([ly["wq"], ly["wk"], ly["wv"]], axis=1)   # [H, 3H]
        wslab = wslab.at[l, :, WQKV_OFF:WQKV_OFF + 3 * H].set(wqkv)
        wslab = wslab.at[l, :, WO_OFF:WO_OFF + H].set(ly["wo"])
        wslab = wslab.at[l, :, W1_OFF:W1_OFF + I].set(ly["w1"])
        wslab = wslab.at[l, :, W2T_OFF:W2T_OFF + I].set(ly["w2"].T)
    wslab = wslab.at[L, :, WP_OFF:WP_OFF + H].set(params["pool_w"])
    wslab = wslab.at[L, :, WF_OFF:WF_OFF + O].set(params["fc_w"])

    rows = [params["emb_ln_g"], params["emb_ln_b"]]
    for ly in params["layers"]:
        rows += [ly["bo"], ly["ln1_g"], ly["ln1_b"], ly["b2"], ly["ln2_g"], ly["ln2_b"]]
    rows += [params["pool_b"], jnp.pad(params["fc_b"], (0, H - O))]

    return {
        "word_emb": params["word_emb"],
        "pos_emb": params["pos_emb"],
        "type_emb": params["type_emb"],
        "wslab": wslab.astype(jnp.bfloat16),                              # [L+1, H, 512]
        "vh": jnp.stack(rows).astype(jnp.float32),                        # [2+6L+2, H]
        "vqkv": jnp.stack([jnp.concatenate([ly["bq"], ly["bk"], ly["bv"]])
                           for ly in params["layers"]]).astype(jnp.float32),  # [L, 3H]
        "vi": jnp.stack([ly["b1"] for ly in params["layers"]]).astype(jnp.float32),  # [L, I]
    }


@jax.jit
def transformer_model_forward(packed, ids):
    """Equivalent of TransformerModel.forward: fc(BERT(x).pooled_output)."""
    B, S = ids.shape
    # --- embeddings (data-dependent gathers stay in plain JAX) ---
    # TODO(synk): token_type_ids fixed to 0 and no attention_mask (reference passes only x).
    emb = (packed["word_emb"][ids]
           + packed["pos_emb"][None, :S, :]
           + packed["type_emb"][None, 0:1, :])                 # [B, S, H]
    emb_flat = emb.reshape(B * S, HIDDEN)
    # --- everything else: one fused Pallas kernel ---
    return pallas_transformer_forward(
        emb_flat, packed["wslab"], packed["vh"], packed["vqkv"], packed["vi"],
        batch=B, seq=S)                                         # [B, OUTPUT_SIZE]


# TODO(synk): pretrained BERT weights cannot be loaded here; parameters are
# deterministically random-initialized with the same shapes as a tiny BERT.

if __name__ == "__main__":
    key = jax.random.PRNGKey(0)
    pkey, ikey = jax.random.split(key)
    params = init_params(pkey)
    packed = pack_params(params)   # packing runs once, outside the jitted forward

    B, S = 2, 8
    ids = jax.random.randint(ikey, (B, S), 0, VOCAB, dtype=jnp.int32)

    out = transformer_model_forward(packed, ids)
    out = jax.block_until_ready(out)
    assert out.shape == (B, OUTPUT_SIZE)
    assert bool(jnp.all(jnp.isfinite(out)))
    print("KERNEL_OK")
</pallas_src>

<mosaic_0001>
module attributes {stable_mosaic.version = 11 : i64} {
  func.func @_fused_forward_kernel(%arg0: memref<16x32xf32, #tpu.memory_space<vmem>>, %arg1: memref<3x32x512xbf16, #tpu.memory_space<vmem>>, %arg2: memref<16x32xf32, #tpu.memory_space<vmem>>, %arg3: memref<2x96xf32, #tpu.memory_space<vmem>>, %arg4: memref<2x64xf32, #tpu.memory_space<vmem>>, %arg5: memref<2x4xf32, #tpu.memory_space<vmem>>) attributes {dimension_semantics = [], scalar_prefetch = 0 : i64, scratch_operands = 0 : i64, tpu.core_type = #tpu.core_type<tc>} {
    %c0 = arith.constant 0 : index
    %c0_0 = arith.constant 0 : index
    %0 = vector.load %arg2[%c0, %c0_0] : memref<16x32xf32, #tpu.memory_space<vmem>>, vector<16x32xf32>
    %c0_1 = arith.constant 0 : index
    %c0_2 = arith.constant 0 : index
    %1 = vector.load %arg3[%c0_1, %c0_2] : memref<2x96xf32, #tpu.memory_space<vmem>>, vector<2x96xf32>
    %c0_3 = arith.constant 0 : index
    %c0_4 = arith.constant 0 : index
    %2 = vector.load %arg4[%c0_3, %c0_4] : memref<2x64xf32, #tpu.memory_space<vmem>>, vector<2x64xf32>
    %c0_5 = arith.constant 0 : index
    %c0_6 = arith.constant 0 : index
    %3 = vector.load %arg0[%c0_5, %c0_6] : memref<16x32xf32, #tpu.memory_space<vmem>>, vector<16x32xf32>
    %4 = vector.extract_strided_slice %0 {offsets = [0, 0], sizes = [1, 32], strides = [1, 1]} : vector<16x32xf32> to vector<1x32xf32>
    %5 = vector.extract_strided_slice %0 {offsets = [1, 0], sizes = [1, 32], strides = [1, 1]} : vector<16x32xf32> to vector<1x32xf32>
    %cst = arith.constant dense<0.000000e+00> : vector<16xf32>
    %6 = vector.multi_reduction <add>, %3, %cst [1] : vector<16x32xf32> to vector<16xf32>
    %7 = vector.shape_cast %6 : vector<16xf32> to vector<16x1xf32>
    %cst_7 = arith.constant 3.200000e+01 : f32
    %8 = vector.broadcast %cst_7 : f32 to vector<16x1xf32>
    %9 = arith.divf %7, %8 : vector<16x1xf32>
    %10 = vector.broadcast %9 : vector<16x1xf32> to vector<16x32xf32>
    %11 = arith.subf %3, %10 : vector<16x32xf32>
    %12 = arith.mulf %11, %11 : vector<16x32xf32>
    %cst_8 = arith.constant dense<0.000000e+00> : vector<16xf32>
    %13 = vector.multi_reduction <add>, %12, %cst_8 [1] : vector<16x32xf32> to vector<16xf32>
    %14 = vector.shape_cast %13 : vector<16xf32> to vector<16x1xf32>
    %cst_9 = arith.constant 3.200000e+01 : f32
    %15 = vector.broadcast %cst_9 : f32 to vector<16x1xf32>
    %16 = arith.divf %14, %15 : vector<16x1xf32>
    %cst_10 = arith.constant 9.99999996E-13 : f32
    %17 = vector.broadcast %cst_10 : f32 to vector<16x1xf32>
    %18 = arith.addf %16, %17 : vector<16x1xf32>
    %19 = math.rsqrt %18 : vector<16x1xf32>
    %20 = vector.broadcast %19 : vector<16x1xf32> to vector<16x32xf32>
    %21 = arith.mulf %11, %20 : vector<16x32xf32>
    %22 = vector.broadcast %4 : vector<1x32xf32> to vector<16x32xf32>
    %23 = arith.mulf %21, %22 : vector<16x32xf32>
    %24 = vector.broadcast %5 : vector<1x32xf32> to vector<16x32xf32>
    %25 = arith.addf %23, %24 : vector<16x32xf32>
    %c0_11 = arith.constant 0 : index
    %c0_12 = arith.constant 0 : index
    %c0_13 = arith.constant 0 : index
    %26 = vector.load %arg1[%c0_11, %c0_12, %c0_13] : memref<3x32x512xbf16, #tpu.memory_space<vmem>>, vector<1x32x512xbf16>
    %27 = vector.shape_cast %26 : vector<1x32x512xbf16> to vector<32x512xbf16>
    %28 = vector.extract_strided_slice %27 {offsets = [0, 0], sizes = [32, 96], strides = [1, 1]} : vector<32x512xbf16> to vector<32x96xbf16>
    %29 = vector.extract_strided_slice %27 {offsets = [0, 128], sizes = [32, 32], strides = [1, 1]} : vector<32x512xbf16> to vector<32x32xbf16>
    %30 = vector.extract_strided_slice %27 {offsets = [0, 256], sizes = [32, 64], strides = [1, 1]} : vector<32x512xbf16> to vector<32x64xbf16>
    %31 = vector.extract_strided_slice %27 {offsets = [0, 384], sizes = [32, 64], strides = [1, 1]} : vector<32x512xbf16> to vector<32x64xbf16>
    %32 = arith.truncf %25 : vector<16x32xf32> to vector<16x32xbf16>
    %cst_14 = arith.constant dense<0.000000e+00> : vector<16x96xf32>
    %33 = tpu.matmul %32, %28, %cst_14 {dimension_numbers = #tpu.dot_dimension_numbers<[1], [0], [0], [1], [0, 0, 1, 1], [], []>} : vector<16x32xbf16>, vector<32x96xbf16>, vector<16x96xf32> -> vector<16x96xf32>
    %34 = vector.extract_strided_slice %1 {offsets = [0, 0], sizes = [1, 96], strides = [1, 1]} : vector<2x96xf32> to vector<1x96xf32>
    %35 = vector.broadcast %34 : vector<1x96xf32> to vector<16x96xf32>
    %36 = arith.addf %33, %35 : vector<16x96xf32>
    %37 = vector.extract_strided_slice %36 {offsets = [0, 0], sizes = [16, 8], strides = [1, 1]} : vector<16x96xf32> to vector<16x8xf32>
    %38 = vector.shape_cast %37 : vector<16x8xf32> to vector<2x8x8xf32>
    %39 = arith.truncf %38 : vector<2x8x8xf32> to vector<2x8x8xbf16>
    %40 = vector.extract_strided_slice %36 {offsets = [0, 32], sizes = [16, 8], strides = [1, 1]} : vector<16x96xf32> to vector<16x8xf32>
    %41 = vector.shape_cast %40 : vector<16x8xf32> to vector<2x8x8xf32>
    %42 = arith.truncf %41 : vector<2x8x8xf32> to vector<2x8x8xbf16>
    %43 = vector.extract_strided_slice %36 {offsets = [0, 64], sizes = [16, 8], strides = [1, 1]} : vector<16x96xf32> to vector<16x8xf32>
    %44 = vector.shape_cast %43 : vector<16x8xf32> to vector<2x8x8xf32>
    %45 = arith.truncf %44 : vector<2x8x8xf32> to vector<2x8x8xbf16>
    "tpu.trace_start"() <{level = 10 : i32, message = "bqd,bkd->bqk"}> : () -> ()
    %cst_15 = arith.constant dense<0.000000e+00> : vector<2x8x8xf32>
    %46 = tpu.matmul %39, %42, %cst_15 {dimension_numbers = #tpu.dot_dimension_numbers<[2], [2], [1], [1], [0, 0, 0, 1, 1, 1], [0], [0]>} : vector<2x8x8xbf16>, vector<2x8x8xbf16>, vector<2x8x8xf32> -> vector<2x8x8xf32>
    "tpu.trace_stop"() : () -> ()
    %cst_16 = arith.constant 0.353553385 : f32
    %47 = vector.broadcast %cst_16 : f32 to vector<2x8x8xf32>
    %48 = arith.mulf %46, %47 : vector<2x8x8xf32>
    %cst_17 = arith.constant dense<0xFF800000> : vector<2x8xf32>
    %49 = vector.multi_reduction <maximumf>, %48, %cst_17 [2] : vector<2x8x8xf32> to vector<2x8xf32>
    %50 = vector.shape_cast %49 : vector<2x8xf32> to vector<2x8x1xf32>
    %51 = vector.broadcast %50 : vector<2x8x1xf32> to vector<2x8x8xf32>
    %52 = arith.subf %48, %51 : vector<2x8x8xf32>
    %53 = math.exp %52 : vector<2x8x8xf32>
    %cst_18 = arith.constant dense<0.000000e+00> : vector<2x8xf32>
    %54 = vector.multi_reduction <add>, %53, %cst_18 [2] : vector<2x8x8xf32> to vector<2x8xf32>
    %55 = vector.shape_cast %54 : vector<2x8xf32> to vector<2x8x1xf32>
    %56 = tpu.reciprocal %55 {approx = true} : vector<2x8x1xf32> -> vector<2x8x1xf32>
    %57 = vector.broadcast %56 : vector<2x8x1xf32> to vector<2x8x8xf32>
    %58 = arith.mulf %53, %57 : vector<2x8x8xf32>
    %59 = arith.truncf %58 : vector<2x8x8xf32> to vector<2x8x8xbf16>
    "tpu.trace_start"() <{level = 10 : i32, message = "bqk,bkd->bqd"}> : () -> ()
    %cst_19 = arith.constant dense<0.000000e+00> : vector<2x8x8xf32>
    %60 = tpu.matmul %59, %45, %cst_19 {dimension_numbers = #tpu.dot_dimension_numbers<[2], [1], [1], [2], [0, 0, 0, 1, 1, 2], [0], [0]>} : vector<2x8x8xbf16>, vector<2x8x8xbf16>, vector<2x8x8xf32> -> vector<2x8x8xf32>
    "tpu.trace_stop"() : () -> ()
    %61 = vector.shape_cast %60 : vector<2x8x8xf32> to vector<16x8xf32>
    %62 = vector.extract_strided_slice %36 {offsets = [0, 8], sizes = [16, 8], strides = [1, 1]} : vector<16x96xf32> to vector<16x8xf32>
    %63 = vector.shape_cast %62 : vector<16x8xf32> to vector<2x8x8xf32>
    %64 = arith.truncf %63 : vector<2x8x8xf32> to vector<2x8x8xbf16>
    %65 = vector.extract_strided_slice %36 {offsets = [0, 40], sizes = [16, 8], strides = [1, 1]} : vector<16x96xf32> to vector<16x8xf32>
    %66 = vector.shape_cast %65 : vector<16x8xf32> to vector<2x8x8xf32>
    %67 = arith.truncf %66 : vector<2x8x8xf32> to vector<2x8x8xbf16>
    %68 = vector.extract_strided_slice %36 {offsets = [0, 72], sizes = [16, 8], strides = [1, 1]} : vector<16x96xf32> to vector<16x8xf32>
    %69 = vector.shape_cast %68 : vector<16x8xf32> to vector<2x8x8xf32>
    %70 = arith.truncf %69 : vector<2x8x8xf32> to vector<2x8x8xbf16>
    "tpu.trace_start"() <{level = 10 : i32, message = "bqd,bkd->bqk"}> : () -> ()
    %cst_20 = arith.constant dense<0.000000e+00> : vector<2x8x8xf32>
    %71 = tpu.matmul %64, %67, %cst_20 {dimension_numbers = #tpu.dot_dimension_numbers<[2], [2], [1], [1], [0, 0, 0, 1, 1, 1], [0], [0]>} : vector<2x8x8xbf16>, vector<2x8x8xbf16>, vector<2x8x8xf32> -> vector<2x8x8xf32>
    "tpu.trace_stop"() : () -> ()
    %cst_21 = arith.constant 0.353553385 : f32
    %72 = vector.broadcast %cst_21 : f32 to vector<2x8x8xf32>
    %73 = arith.mulf %71, %72 : vector<2x8x8xf32>
    %cst_22 = arith.constant dense<0xFF800000> : vector<2x8xf32>
    %74 = vector.multi_reduction <maximumf>, %73, %cst_22 [2] : vector<2x8x8xf32> to vector<2x8xf32>
    %75 = vector.shape_cast %74 : vector<2x8xf32> to vector<2x8x1xf32>
    %76 = vector.broadcast %75 : vector<2x8x1xf32> to vector<2x8x8xf32>
    %77 = arith.subf %73, %76 : vector<2x8x8xf32>
    %78 = math.exp %77 : vector<2x8x8xf32>
    %cst_23 = arith.constant dense<0.000000e+00> : vector<2x8xf32>
    %79 = vector.multi_reduction <add>, %78, %cst_23 [2] : vector<2x8x8xf32> to vector<2x8xf32>
    %80 = vector.shape_cast %79 : vector<2x8xf32> to vector<2x8x1xf32>
    %81 = tpu.reciprocal %80 {approx = true} : vector<2x8x1xf32> -> vector<2x8x1xf32>
    %82 = vector.broadcast %81 : vector<2x8x1xf32> to vector<2x8x8xf32>
    %83 = arith.mulf %78, %82 : vector<2x8x8xf32>
    %84 = arith.truncf %83 : vector<2x8x8xf32> to vector<2x8x8xbf16>
    "tpu.trace_start"() <{level = 10 : i32, message = "bqk,bkd->bqd"}> : () -> ()
    %cst_24 = arith.constant dense<0.000000e+00> : vector<2x8x8xf32>
    %85 = tpu.matmul %84, %70, %cst_24 {dimension_numbers = #tpu.dot_dimension_numbers<[2], [1], [1], [2], [0, 0, 0, 1, 1, 2], [0], [0]>} : vector<2x8x8xbf16>, vector<2x8x8xbf16>, vector<2x8x8xf32> -> vector<2x8x8xf32>
    "tpu.trace_stop"() : () -> ()
    %86 = vector.shape_cast %85 : vector<2x8x8xf32> to vector<16x8xf32>
    %87 = vector.extract_strided_slice %36 {offsets = [0, 16], sizes = [16, 8], strides = [1, 1]} : vector<16x96xf32> to vector<16x8xf32>
    %88 = vector.shape_cast %87 : vector<16x8xf32> to vector<2x8x8xf32>
    %89 = arith.truncf %88 : vector<2x8x8xf32> to vector<2x8x8xbf16>
    %90 = vector.extract_strided_slice %36 {offsets = [0, 48], sizes = [16, 8], strides = [1, 1]} : vector<16x96xf32> to vector<16x8xf32>
    %91 = vector.shape_cast %90 : vector<16x8xf32> to vector<2x8x8xf32>
    %92 = arith.truncf %91 : vector<2x8x8xf32> to vector<2x8x8xbf16>
    %93 = vector.extract_strided_slice %36 {offsets = [0, 80], sizes = [16, 8], strides = [1, 1]} : vector<16x96xf32> to vector<16x8xf32>
    %94 = vector.shape_cast %93 : vector<16x8xf32> to vector<2x8x8xf32>
    %95 = arith.truncf %94 : vector<2x8x8xf32> to vector<2x8x8xbf16>
    "tpu.trace_start"() <{level = 10 : i32, message = "bqd,bkd->bqk"}> : () -> ()
    %cst_25 = arith.constant dense<0.000000e+00> : vector<2x8x8xf32>
    %96 = tpu.matmul %89, %92, %cst_25 {dimension_numbers = #tpu.dot_dimension_numbers<[2], [2], [1], [1], [0, 0, 0, 1, 1, 1], [0], [0]>} : vector<2x8x8xbf16>, vector<2x8x8xbf16>, vector<2x8x8xf32> -> vector<2x8x8xf32>
    "tpu.trace_stop"() : () -> ()
    %cst_26 = arith.constant 0.353553385 : f32
    %97 = vector.broadcast %cst_26 : f32 to vector<2x8x8xf32>
    %98 = arith.mulf %96, %97 : vector<2x8x8xf32>
    %cst_27 = arith.constant dense<0xFF800000> : vector<2x8xf32>
    %99 = vector.multi_reduction <maximumf>, %98, %cst_27 [2] : vector<2x8x8xf32> to vector<2x8xf32>
    %100 = vector.shape_cast %99 : vector<2x8xf32> to vector<2x8x1xf32>
    %101 = vector.broadcast %100 : vector<2x8x1xf32> to vector<2x8x8xf32>
    %102 = arith.subf %98, %101 : vector<2x8x8xf32>
    %103 = math.exp %102 : vector<2x8x8xf32>
    %cst_28 = arith.constant dense<0.000000e+00> : vector<2x8xf32>
    %104 = vector.multi_reduction <add>, %103, %cst_28 [2] : vector<2x8x8xf32> to vector<2x8xf32>
    %105 = vector.shape_cast %104 : vector<2x8xf32> to vector<2x8x1xf32>
    %106 = tpu.reciprocal %105 {approx = true} : vector<2x8x1xf32> -> vector<2x8x1xf32>
    %107 = vector.broadcast %106 : vector<2x8x1xf32> to vector<2x8x8xf32>
    %108 = arith.mulf %103, %107 : vector<2x8x8xf32>
    %109 = arith.truncf %108 : vector<2x8x8xf32> to vector<2x8x8xbf16>
    "tpu.trace_start"() <{level = 10 : i32, message = "bqk,bkd->bqd"}> : () -> ()
    %cst_29 = arith.constant dense<0.000000e+00> : vector<2x8x8xf32>
    %110 = tpu.matmul %109, %95, %cst_29 {dimension_numbers = #tpu.dot_dimension_numbers<[2], [1], [1], [2], [0, 0, 0, 1, 1, 2], [0], [0]>} : vector<2x8x8xbf16>, vector<2x8x8xbf16>, vector<2x8x8xf32> -> vector<2x8x8xf32>
    "tpu.trace_stop"() : () -> ()
    %111 = vector.shape_cast %110 : vector<2x8x8xf32> to vector<16x8xf32>
    %112 = vector.extract_strided_slice %36 {offsets = [0, 24], sizes = [16, 8], strides = [1, 1]} : vector<16x96xf32> to vector<16x8xf32>
    %113 = vector.shape_cast %112 : vector<16x8xf32> to vector<2x8x8xf32>
    %114 = arith.truncf %113 : vector<2x8x8xf32> to vector<2x8x8xbf16>
    %115 = vector.extract_strided_slice %36 {offsets = [0, 56], sizes = [16, 8], strides = [1, 1]} : vector<16x96xf32> to vector<16x8xf32>
    %116 = vector.shape_cast %115 : vector<16x8xf32> to vector<2x8x8xf32>
    %117 = arith.truncf %116 : vector<2x8x8xf32> to vector<2x8x8xbf16>
    %118 = vector.extract_strided_slice %36 {offsets = [0, 88], sizes = [16, 8], strides = [1, 1]} : vector<16x96xf32> to vector<16x8xf32>
    %119 = vector.shape_cast %118 : vector<16x8xf32> to vector<2x8x8xf32>
    %120 = arith.truncf %119 : vector<2x8x8xf32> to vector<2x8x8xbf16>
    "tpu.trace_start"() <{level = 10 : i32, message = "bqd,bkd->bqk"}> : () -> ()
    %cst_30 = arith.constant dense<0.000000e+00> : vector<2x8x8xf32>
    %121 = tpu.matmul %114, %117, %cst_30 {dimension_numbers = #tpu.dot_dimension_numbers<[2], [2], [1], [1], [0, 0, 0, 1, 1, 1], [0], [0]>} : vector<2x8x8xbf16>, vector<2x8x8xbf16>, vector<2x8x8xf32> -> vector<2x8x8xf32>
    "tpu.trace_stop"() : () -> ()
    %cst_31 = arith.constant 0.353553385 : f32
    %122 = vector.broadcast %cst_31 : f32 to vector<2x8x8xf32>
    %123 = arith.mulf %121, %122 : vector<2x8x8xf32>
    %cst_32 = arith.constant dense<0xFF800000> : vector<2x8xf32>
    %124 = vector.multi_reduction <maximumf>, %123, %cst_32 [2] : vector<2x8x8xf32> to vector<2x8xf32>
    %125 = vector.shape_cast %124 : vector<2x8xf32> to vector<2x8x1xf32>
    %126 = vector.broadcast %125 : vector<2x8x1xf32> to vector<2x8x8xf32>
    %127 = arith.subf %123, %126 : vector<2x8x8xf32>
    %128 = math.exp %127 : vector<2x8x8xf32>
    %cst_33 = arith.constant dense<0.000000e+00> : vector<2x8xf32>
    %129 = vector.multi_reduction <add>, %128, %cst_33 [2] : vector<2x8x8xf32> to vector<2x8xf32>
    %130 = vector.shape_cast %129 : vector<2x8xf32> to vector<2x8x1xf32>
    %131 = tpu.reciprocal %130 {approx = true} : vector<2x8x1xf32> -> vector<2x8x1xf32>
    %132 = vector.broadcast %131 : vector<2x8x1xf32> to vector<2x8x8xf32>
    %133 = arith.mulf %128, %132 : vector<2x8x8xf32>
    %134 = arith.truncf %133 : vector<2x8x8xf32> to vector<2x8x8xbf16>
    "tpu.trace_start"() <{level = 10 : i32, message = "bqk,bkd->bqd"}> : () -> ()
    %cst_34 = arith.constant dense<0.000000e+00> : vector<2x8x8xf32>
    %135 = tpu.matmul %134, %120, %cst_34 {dimension_numbers = #tpu.dot_dimension_numbers<[2], [1], [1], [2], [0, 0, 0, 1, 1, 2], [0], [0]>} : vector<2x8x8xbf16>, vector<2x8x8xbf16>, vector<2x8x8xf32> -> vector<2x8x8xf32>
    "tpu.trace_stop"() : () -> ()
    %136 = vector.shape_cast %135 : vector<2x8x8xf32> to vector<16x8xf32>
    %137 = tpu.concatenate %61, %86, %111, %136 in 1 : vector<16x8xf32>, vector<16x8xf32>, vector<16x8xf32>, vector<16x8xf32> -> vector<16x32xf32>
    %138 = arith.truncf %137 : vector<16x32xf32> to vector<16x32xbf16>
    %cst_35 = arith.constant dense<0.000000e+00> : vector<16x32xf32>
    %139 = tpu.matmul %138, %29, %cst_35 {dimension_numbers = #tpu.dot_dimension_numbers<[1], [0], [0], [1], [0, 0, 1, 1], [], []>} : vector<16x32xbf16>, vector<32x32xbf16>, vector<16x32xf32> -> vector<16x32xf32>
    %140 = vector.extract_strided_slice %0 {offsets = [2, 0], sizes = [1, 32], strides = [1, 1]} : vector<16x32xf32> to vector<1x32xf32>
    %141 = vector.broadcast %140 : vector<1x32xf32> to vector<16x32xf32>
    %142 = arith.addf %139, %141 : vector<16x32xf32>
    %143 = arith.addf %142, %25 : vector<16x32xf32>
    %144 = vector.extract_strided_slice %0 {offsets = [3, 0], sizes = [1, 32], strides = [1, 1]} : vector<16x32xf32> to vector<1x32xf32>
    %145 = vector.extract_strided_slice %0 {offsets = [4, 0], sizes = [1, 32], strides = [1, 1]} : vector<16x32xf32> to vector<1x32xf32>
    %cst_36 = arith.constant dense<0.000000e+00> : vector<16xf32>
    %146 = vector.multi_reduction <add>, %143, %cst_36 [1] : vector<16x32xf32> to vector<16xf32>
    %147 = vector.shape_cast %146 : vector<16xf32> to vector<16x1xf32>
    %cst_37 = arith.constant 3.200000e+01 : f32
    %148 = vector.broadcast %cst_37 : f32 to vector<16x1xf32>
    %149 = arith.divf %147, %148 : vector<16x1xf32>
    %150 = vector.broadcast %149 : vector<16x1xf32> to vector<16x32xf32>
    %151 = arith.subf %143, %150 : vector<16x32xf32>
    %152 = arith.mulf %151, %151 : vector<16x32xf32>
    %cst_38 = arith.constant dense<0.000000e+00> : vector<16xf32>
    %153 = vector.multi_reduction <add>, %152, %cst_38 [1] : vector<16x32xf32> to vector<16xf32>
    %154 = vector.shape_cast %153 : vector<16xf32> to vector<16x1xf32>
    %cst_39 = arith.constant 3.200000e+01 : f32
    %155 = vector.broadcast %cst_39 : f32 to vector<16x1xf32>
    %156 = arith.divf %154, %155 : vector<16x1xf32>
    %cst_40 = arith.constant 9.99999996E-13 : f32
    %157 = vector.broadcast %cst_40 : f32 to vector<16x1xf32>
    %158 = arith.addf %156, %157 : vector<16x1xf32>
    %159 = math.rsqrt %158 : vector<16x1xf32>
    %160 = vector.broadcast %159 : vector<16x1xf32> to vector<16x32xf32>
    %161 = arith.mulf %151, %160 : vector<16x32xf32>
    %162 = vector.broadcast %144 : vector<1x32xf32> to vector<16x32xf32>
    %163 = arith.mulf %161, %162 : vector<16x32xf32>
    %164 = vector.broadcast %145 : vector<1x32xf32> to vector<16x32xf32>
    %165 = arith.addf %163, %164 : vector<16x32xf32>
    %166 = arith.truncf %165 : vector<16x32xf32> to vector<16x32xbf16>
    %cst_41 = arith.constant dense<0.000000e+00> : vector<16x64xf32>
    %167 = tpu.matmul %166, %30, %cst_41 {dimension_numbers = #tpu.dot_dimension_numbers<[1], [0], [0], [1], [0, 0, 1, 1], [], []>} : vector<16x32xbf16>, vector<32x64xbf16>, vector<16x64xf32> -> vector<16x64xf32>
    %168 = vector.extract_strided_slice %2 {offsets = [0, 0], sizes = [1, 64], strides = [1, 1]} : vector<2x64xf32> to vector<1x64xf32>
    %169 = vector.broadcast %168 : vector<1x64xf32> to vector<16x64xf32>
    %170 = arith.addf %167, %169 : vector<16x64xf32>
    %171 = arith.mulf %170, %170 : vector<16x64xf32>
    %172 = arith.mulf %170, %171 : vector<16x64xf32>
    %cst_42 = arith.constant 4.471500e-02 : f32
    %173 = vector.broadcast %cst_42 : f32 to vector<16x64xf32>
    %174 = arith.mulf %173, %172 : vector<16x64xf32>
    %175 = arith.addf %170, %174 : vector<16x64xf32>
    %cst_43 = arith.constant 0.797884583 : f32
    %176 = vector.broadcast %cst_43 : f32 to vector<16x64xf32>
    %177 = arith.mulf %176, %175 : vector<16x64xf32>
    %178 = math.tanh %177 : vector<16x64xf32>
    %cst_44 = arith.constant 1.000000e+00 : f32
    %179 = vector.broadcast %cst_44 : f32 to vector<16x64xf32>
    %180 = arith.addf %179, %178 : vector<16x64xf32>
    %cst_45 = arith.constant 5.000000e-01 : f32
    %181 = vector.broadcast %cst_45 : f32 to vector<16x64xf32>
    %182 = arith.mulf %181, %180 : vector<16x64xf32>
    %183 = arith.mulf %170, %182 : vector<16x64xf32>
    %184 = arith.truncf %183 : vector<16x64xf32> to vector<16x64xbf16>
    %cst_46 = arith.constant dense<0.000000e+00> : vector<16x32xf32>
    %185 = tpu.matmul %184, %31, %cst_46 {dimension_numbers = #tpu.dot_dimension_numbers<[1], [1], [0], [0], [0, 0, 1, 0], [], []>} : vector<16x64xbf16>, vector<32x64xbf16>, vector<16x32xf32> -> vector<16x32xf32>
    %186 = vector.extract_strided_slice %0 {offsets = [5, 0], sizes = [1, 32], strides = [1, 1]} : vector<16x32xf32> to vector<1x32xf32>
    %187 = vector.broadcast %186 : vector<1x32xf32> to vector<16x32xf32>
    %188 = arith.addf %185, %187 : vector<16x32xf32>
    %189 = arith.addf %188, %165 : vector<16x32xf32>
    %190 = vector.extract_strided_slice %0 {offsets = [6, 0], sizes = [1, 32], strides = [1, 1]} : vector<16x32xf32> to vector<1x32xf32>
    %191 = vector.extract_strided_slice %0 {offsets = [7, 0], sizes = [1, 32], strides = [1, 1]} : vector<16x32xf32> to vector<1x32xf32>
    %cst_47 = arith.constant dense<0.000000e+00> : vector<16xf32>
    %192 = vector.multi_reduction <add>, %189, %cst_47 [1] : vector<16x32xf32> to vector<16xf32>
    %193 = vector.shape_cast %192 : vector<16xf32> to vector<16x1xf32>
    %cst_48 = arith.constant 3.200000e+01 : f32
    %194 = vector.broadcast %cst_48 : f32 to vector<16x1xf32>
    %195 = arith.divf %193, %194 : vector<16x1xf32>
    %196 = vector.broadcast %195 : vector<16x1xf32> to vector<16x32xf32>
    %197 = arith.subf %189, %196 : vector<16x32xf32>
    %198 = arith.mulf %197, %197 : vector<16x32xf32>
    %cst_49 = arith.constant dense<0.000000e+00> : vector<16xf32>
    %199 = vector.multi_reduction <add>, %198, %cst_49 [1] : vector<16x32xf32> to vector<16xf32>
    %200 = vector.shape_cast %199 : vector<16xf32> to vector<16x1xf32>
    %cst_50 = arith.constant 3.200000e+01 : f32
    %201 = vector.broadcast %cst_50 : f32 to vector<16x1xf32>
    %202 = arith.divf %200, %201 : vector<16x1xf32>
    %cst_51 = arith.constant 9.99999996E-13 : f32
    %203 = vector.broadcast %cst_51 : f32 to vector<16x1xf32>
    %204 = arith.addf %202, %203 : vector<16x1xf32>
    %205 = math.rsqrt %204 : vector<16x1xf32>
    %206 = vector.broadcast %205 : vector<16x1xf32> to vector<16x32xf32>
    %207 = arith.mulf %197, %206 : vector<16x32xf32>
    %208 = vector.broadcast %190 : vector<1x32xf32> to vector<16x32xf32>
    %209 = arith.mulf %207, %208 : vector<16x32xf32>
    %210 = vector.broadcast %191 : vector<1x32xf32> to vector<16x32xf32>
    %211 = arith.addf %209, %210 : vector<16x32xf32>
    %c1 = arith.constant 1 : index
    %c0_52 = arith.constant 0 : index
    %c0_53 = arith.constant 0 : index
    %212 = vector.load %arg1[%c1, %c0_52, %c0_53] : memref<3x32x512xbf16, #tpu.memory_space<vmem>>, vector<1x32x512xbf16>
    %213 = vector.shape_cast %212 : vector<1x32x512xbf16> to vector<32x512xbf16>
    %214 = vector.extract_strided_slice %213 {offsets = [0, 0], sizes = [32, 96], strides = [1, 1]} : vector<32x512xbf16> to vector<32x96xbf16>
    %215 = vector.extract_strided_slice %213 {offsets = [0, 128], sizes = [32, 32], strides = [1, 1]} : vector<32x512xbf16> to vector<32x32xbf16>
    %216 = vector.extract_strided_slice %213 {offsets = [0, 256], sizes = [32, 64], strides = [1, 1]} : vector<32x512xbf16> to vector<32x64xbf16>
    %217 = vector.extract_strided_slice %213 {offsets = [0, 384], sizes = [32, 64], strides = [1, 1]} : vector<32x512xbf16> to vector<32x64xbf16>
    %218 = arith.truncf %211 : vector<16x32xf32> to vector<16x32xbf16>
    %cst_54 = arith.constant dense<0.000000e+00> : vector<16x96xf32>
    %219 = tpu.matmul %218, %214, %cst_54 {dimension_numbers = #tpu.dot_dimension_numbers<[1], [0], [0], [1], [0, 0, 1, 1], [], []>} : vector<16x32xbf16>, vector<32x96xbf16>, vector<16x96xf32> -> vector<16x96xf32>
    %220 = vector.extract_strided_slice %1 {offsets = [1, 0], sizes = [1, 96], strides = [1, 1]} : vector<2x96xf32> to vector<1x96xf32>
    %221 = vector.broadcast %220 : vector<1x96xf32> to vector<16x96xf32>
    %222 = arith.addf %219, %221 : vector<16x96xf32>
    %223 = vector.extract_strided_slice %222 {offsets = [0, 0], sizes = [16, 8], strides = [1, 1]} : vector<16x96xf32> to vector<16x8xf32>
    %224 = vector.shape_cast %223 : vector<16x8xf32> to vector<2x8x8xf32>
    %225 = arith.truncf %224 : vector<2x8x8xf32> to vector<2x8x8xbf16>
    %226 = vector.extract_strided_slice %222 {offsets = [0, 32], sizes = [16, 8], strides = [1, 1]} : vector<16x96xf32> to vector<16x8xf32>
    %227 = vector.shape_cast %226 : vector<16x8xf32> to vector<2x8x8xf32>
    %228 = arith.truncf %227 : vector<2x8x8xf32> to vector<2x8x8xbf16>
    %229 = vector.extract_strided_slice %222 {offsets = [0, 64], sizes = [16, 8], strides = [1, 1]} : vector<16x96xf32> to vector<16x8xf32>
    %230 = vector.shape_cast %229 : vector<16x8xf32> to vector<2x8x8xf32>
    %231 = arith.truncf %230 : vector<2x8x8xf32> to vector<2x8x8xbf16>
    "tpu.trace_start"() <{level = 10 : i32, message = "bqd,bkd->bqk"}> : () -> ()
    %cst_55 = arith.constant dense<0.000000e+00> : vector<2x8x8xf32>
    %232 = tpu.matmul %225, %228, %cst_55 {dimension_numbers = #tpu.dot_dimension_numbers<[2], [2], [1], [1], [0, 0, 0, 1, 1, 1], [0], [0]>} : vector<2x8x8xbf16>, vector<2x8x8xbf16>, vector<2x8x8xf32> -> vector<2x8x8xf32>
    "tpu.trace_stop"() : () -> ()
    %cst_56 = arith.constant 0.353553385 : f32
    %233 = vector.broadcast %cst_56 : f32 to vector<2x8x8xf32>
    %234 = arith.mulf %232, %233 : vector<2x8x8xf32>
    %cst_57 = arith.constant dense<0xFF800000> : vector<2x8xf32>
    %235 = vector.multi_reduction <maximumf>, %234, %cst_57 [2] : vector<2x8x8xf32> to vector<2x8xf32>
    %236 = vector.shape_cast %235 : vector<2x8xf32> to vector<2x8x1xf32>
    %237 = vector.broadcast %236 : vector<2x8x1xf32> to vector<2x8x8xf32>
    %238 = arith.subf %234, %237 : vector<2x8x8xf32>
    %239 = math.exp %238 : vector<2x8x8xf32>
    %cst_58 = arith.constant dense<0.000000e+00> : vector<2x8xf32>
    %240 = vector.multi_reduction <add>, %239, %cst_58 [2] : vector<2x8x8xf32> to vector<2x8xf32>
    %241 = vector.shape_cast %240 : vector<2x8xf32> to vector<2x8x1xf32>
    %242 = tpu.reciprocal %241 {approx = true} : vector<2x8x1xf32> -> vector<2x8x1xf32>
    %243 = vector.broadcast %242 : vector<2x8x1xf32> to vector<2x8x8xf32>
    %244 = arith.mulf %239, %243 : vector<2x8x8xf32>
    %245 = arith.truncf %244 : vector<2x8x8xf32> to vector<2x8x8xbf16>
    "tpu.trace_start"() <{level = 10 : i32, message = "bqk,bkd->bqd"}> : () -> ()
    %cst_59 = arith.constant dense<0.000000e+00> : vector<2x8x8xf32>
    %246 = tpu.matmul %245, %231, %cst_59 {dimension_numbers = #tpu.dot_dimension_numbers<[2], [1], [1], [2], [0, 0, 0, 1, 1, 2], [0], [0]>} : vector<2x8x8xbf16>, vector<2x8x8xbf16>, vector<2x8x8xf32> -> vector<2x8x8xf32>
    "tpu.trace_stop"() : () -> ()
    %247 = vector.shape_cast %246 : vector<2x8x8xf32> to vector<16x8xf32>
    %248 = vector.extract_strided_slice %222 {offsets = [0, 8], sizes = [16, 8], strides = [1, 1]} : vector<16x96xf32> to vector<16x8xf32>
    %249 = vector.shape_cast %248 : vector<16x8xf32> to vector<2x8x8xf32>
    %250 = arith.truncf %249 : vector<2x8x8xf32> to vector<2x8x8xbf16>
    %251 = vector.extract_strided_slice %222 {offsets = [0, 40], sizes = [16, 8], strides = [1, 1]} : vector<16x96xf32> to vector<16x8xf32>
    %252 = vector.shape_cast %251 : vector<16x8xf32> to vector<2x8x8xf32>
    %253 = arith.truncf %252 : vector<2x8x8xf32> to vector<2x8x8xbf16>
    %254 = vector.extract_strided_slice %222 {offsets = [0, 72], sizes = [16, 8], strides = [1, 1]} : vector<16x96xf32> to vector<16x8xf32>
    %255 = vector.shape_cast %254 : vector<16x8xf32> to vector<2x8x8xf32>
    %256 = arith.truncf %255 : vector<2x8x8xf32> to vector<2x8x8xbf16>
    "tpu.trace_start"() <{level = 10 : i32, message = "bqd,bkd->bqk"}> : () -> ()
    %cst_60 = arith.constant dense<0.000000e+00> : vector<2x8x8xf32>
    %257 = tpu.matmul %250, %253, %cst_60 {dimension_numbers = #tpu.dot_dimension_numbers<[2], [2], [1], [1], [0, 0, 0, 1, 1, 1], [0], [0]>} : vector<2x8x8xbf16>, vector<2x8x8xbf16>, vector<2x8x8xf32> -> vector<2x8x8xf32>
    "tpu.trace_stop"() : () -> ()
    %cst_61 = arith.constant 0.353553385 : f32
    %258 = vector.broadcast %cst_61 : f32 to vector<2x8x8xf32>
    %259 = arith.mulf %257, %258 : vector<2x8x8xf32>
    %cst_62 = arith.constant dense<0xFF800000> : vector<2x8xf32>
    %260 = vector.multi_reduction <maximumf>, %259, %cst_62 [2] : vector<2x8x8xf32> to vector<2x8xf32>
    %261 = vector.shape_cast %260 : vector<2x8xf32> to vector<2x8x1xf32>
    %262 = vector.broadcast %261 : vector<2x8x1xf32> to vector<2x8x8xf32>
    %263 = arith.subf %259, %262 : vector<2x8x8xf32>
    %264 = math.exp %263 : vector<2x8x8xf32>
    %cst_63 = arith.constant dense<0.000000e+00> : vector<2x8xf32>
    %265 = vector.multi_reduction <add>, %264, %cst_63 [2] : vector<2x8x8xf32> to vector<2x8xf32>
    %266 = vector.shape_cast %265 : vector<2x8xf32> to vector<2x8x1xf32>
    %267 = tpu.reciprocal %266 {approx = true} : vector<2x8x1xf32> -> vector<2x8x1xf32>
    %268 = vector.broadcast %267 : vector<2x8x1xf32> to vector<2x8x8xf32>
    %269 = arith.mulf %264, %268 : vector<2x8x8xf32>
    %270 = arith.truncf %269 : vector<2x8x8xf32> to vector<2x8x8xbf16>
    "tpu.trace_start"() <{level = 10 : i32, message = "bqk,bkd->bqd"}> : () -> ()
    %cst_64 = arith.constant dense<0.000000e+00> : vector<2x8x8xf32>
    %271 = tpu.matmul %270, %256, %cst_64 {dimension_numbers = #tpu.dot_dimension_numbers<[2], [1], [1], [2], [0, 0, 0, 1, 1, 2], [0], [0]>} : vector<2x8x8xbf16>, vector<2x8x8xbf16>, vector<2x8x8xf32> -> vector<2x8x8xf32>
    "tpu.trace_stop"() : () -> ()
    %272 = vector.shape_cast %271 : vector<2x8x8xf32> to vector<16x8xf32>
    %273 = vector.extract_strided_slice %222 {offsets = [0, 16], sizes = [16, 8], strides = [1, 1]} : vector<16x96xf32> to vector<16x8xf32>
    %274 = vector.shape_cast %273 : vector<16x8xf32> to vector<2x8x8xf32>
    %275 = arith.truncf %274 : vector<2x8x8xf32> to vector<2x8x8xbf16>
    %276 = vector.extract_strided_slice %222 {offsets = [0, 48], sizes = [16, 8], strides = [1, 1]} : vector<16x96xf32> to vector<16x8xf32>
    %277 = vector.shape_cast %276 : vector<16x8xf32> to vector<2x8x8xf32>
    %278 = arith.truncf %277 : vector<2x8x8xf32> to vector<2x8x8xbf16>
    %279 = vector.extract_strided_slice %222 {offsets = [0, 80], sizes = [16, 8], strides = [1, 1]} : vector<16x96xf32> to vector<16x8xf32>
    %280 = vector.shape_cast %279 : vector<16x8xf32> to vector<2x8x8xf32>
    %281 = arith.truncf %280 : vector<2x8x8xf32> to vector<2x8x8xbf16>
    "tpu.trace_start"() <{level = 10 : i32, message = "bqd,bkd->bqk"}> : () -> ()
    %cst_65 = arith.constant dense<0.000000e+00> : vector<2x8x8xf32>
    %282 = tpu.matmul %275, %278, %cst_65 {dimension_numbers = #tpu.dot_dimension_numbers<[2], [2], [1], [1], [0, 0, 0, 1, 1, 1], [0], [0]>} : vector<2x8x8xbf16>, vector<2x8x8xbf16>, vector<2x8x8xf32> -> vector<2x8x8xf32>
    "tpu.trace_stop"() : () -> ()
    %cst_66 = arith.constant 0.353553385 : f32
    %283 = vector.broadcast %cst_66 : f32 to vector<2x8x8xf32>
    %284 = arith.mulf %282, %283 : vector<2x8x8xf32>
    %cst_67 = arith.constant dense<0xFF800000> : vector<2x8xf32>
    %285 = vector.multi_reduction <maximumf>, %284, %cst_67 [2] : vector<2x8x8xf32> to vector<2x8xf32>
    %286 = vector.shape_cast %285 : vector<2x8xf32> to vector<2x8x1xf32>
    %287 = vector.broadcast %286 : vector<2x8x1xf32> to vector<2x8x8xf32>
    %288 = arith.subf %284, %287 : vector<2x8x8xf32>
    %289 = math.exp %288 : vector<2x8x8xf32>
    %cst_68 = arith.constant dense<0.000000e+00> : vector<2x8xf32>
    %290 = vector.multi_reduction <add>, %289, %cst_68 [2] : vector<2x8x8xf32> to vector<2x8xf32>
    %291 = vector.shape_cast %290 : vector<2x8xf32> to vector<2x8x1xf32>
    %292 = tpu.reciprocal %291 {approx = true} : vector<2x8x1xf32> -> vector<2x8x1xf32>
    %293 = vector.broadcast %292 : vector<2x8x1xf32> to vector<2x8x8xf32>
    %294 = arith.mulf %289, %293 : vector<2x8x8xf32>
    %295 = arith.truncf %294 : vector<2x8x8xf32> to vector<2x8x8xbf16>
    "tpu.trace_start"() <{level = 10 : i32, message = "bqk,bkd->bqd"}> : () -> ()
    %cst_69 = arith.constant dense<0.000000e+00> : vector<2x8x8xf32>
    %296 = tpu.matmul %295, %281, %cst_69 {dimension_numbers = #tpu.dot_dimension_numbers<[2], [1], [1], [2], [0, 0, 0, 1, 1, 2], [0], [0]>} : vector<2x8x8xbf16>, vector<2x8x8xbf16>, vector<2x8x8xf32> -> vector<2x8x8xf32>
    "tpu.trace_stop"() : () -> ()
    %297 = vector.shape_cast %296 : vector<2x8x8xf32> to vector<16x8xf32>
    %298 = vector.extract_strided_slice %222 {offsets = [0, 24], sizes = [16, 8], strides = [1, 1]} : vector<16x96xf32> to vector<16x8xf32>
    %299 = vector.shape_cast %298 : vector<16x8xf32> to vector<2x8x8xf32>
    %300 = arith.truncf %299 : vector<2x8x8xf32> to vector<2x8x8xbf16>
    %301 = vector.extract_strided_slice %222 {offsets = [0, 56], sizes = [16, 8], strides = [1, 1]} : vector<16x96xf32> to vector<16x8xf32>
    %302 = vector.shape_cast %301 : vector<16x8xf32> to vector<2x8x8xf32>
    %303 = arith.truncf %302 : vector<2x8x8xf32> to vector<2x8x8xbf16>
    %304 = vector.extract_strided_slice %222 {offsets = [0, 88], sizes = [16, 8], strides = [1, 1]} : vector<16x96xf32> to vector<16x8xf32>
    %305 = vector.shape_cast %304 : vector<16x8xf32> to vector<2x8x8xf32>
    %306 = arith.truncf %305 : vector<2x8x8xf32> to vector<2x8x8xbf16>
    "tpu.trace_start"() <{level = 10 : i32, message = "bqd,bkd->bqk"}> : () -> ()
    %cst_70 = arith.constant dense<0.000000e+00> : vector<2x8x8xf32>
    %307 = tpu.matmul %300, %303, %cst_70 {dimension_numbers = #tpu.dot_dimension_numbers<[2], [2], [1], [1], [0, 0, 0, 1, 1, 1], [0], [0]>} : vector<2x8x8xbf16>, vector<2x8x8xbf16>, vector<2x8x8xf32> -> vector<2x8x8xf32>
    "tpu.trace_stop"() : () -> ()
    %cst_71 = arith.constant 0.353553385 : f32
    %308 = vector.broadcast %cst_71 : f32 to vector<2x8x8xf32>
    %309 = arith.mulf %307, %308 : vector<2x8x8xf32>
    %cst_72 = arith.constant dense<0xFF800000> : vector<2x8xf32>
    %310 = vector.multi_reduction <maximumf>, %309, %cst_72 [2] : vector<2x8x8xf32> to vector<2x8xf32>
    %311 = vector.shape_cast %310 : vector<2x8xf32> to vector<2x8x1xf32>
    %312 = vector.broadcast %311 : vector<2x8x1xf32> to vector<2x8x8xf32>
    %313 = arith.subf %309, %312 : vector<2x8x8xf32>
    %314 = math.exp %313 : vector<2x8x8xf32>
    %cst_73 = arith.constant dense<0.000000e+00> : vector<2x8xf32>
    %315 = vector.multi_reduction <add>, %314, %cst_73 [2] : vector<2x8x8xf32> to vector<2x8xf32>
    %316 = vector.shape_cast %315 : vector<2x8xf32> to vector<2x8x1xf32>
    %317 = tpu.reciprocal %316 {approx = true} : vector<2x8x1xf32> -> vector<2x8x1xf32>
    %318 = vector.broadcast %317 : vector<2x8x1xf32> to vector<2x8x8xf32>
    %319 = arith.mulf %314, %318 : vector<2x8x8xf32>
    %320 = arith.truncf %319 : vector<2x8x8xf32> to vector<2x8x8xbf16>
    "tpu.trace_start"() <{level = 10 : i32, message = "bqk,bkd->bqd"}> : () -> ()
    %cst_74 = arith.constant dense<0.000000e+00> : vector<2x8x8xf32>
    %321 = tpu.matmul %320, %306, %cst_74 {dimension_numbers = #tpu.dot_dimension_numbers<[2], [1], [1], [2], [0, 0, 0, 1, 1, 2], [0], [0]>} : vector<2x8x8xbf16>, vector<2x8x8xbf16>, vector<2x8x8xf32> -> vector<2x8x8xf32>
    "tpu.trace_stop"() : () -> ()
    %322 = vector.shape_cast %321 : vector<2x8x8xf32> to vector<16x8xf32>
    %323 = tpu.concatenate %247, %272, %297, %322 in 1 : vector<16x8xf32>, vector<16x8xf32>, vector<16x8xf32>, vector<16x8xf32> -> vector<16x32xf32>
    %324 = arith.truncf %323 : vector<16x32xf32> to vector<16x32xbf16>
    %cst_75 = arith.constant dense<0.000000e+00> : vector<16x32xf32>
    %325 = tpu.matmul %324, %215, %cst_75 {dimension_numbers = #tpu.dot_dimension_numbers<[1], [0], [0], [1], [0, 0, 1, 1], [], []>} : vector<16x32xbf16>, vector<32x32xbf16>, vector<16x32xf32> -> vector<16x32xf32>
    %326 = vector.extract_strided_slice %0 {offsets = [8, 0], sizes = [1, 32], strides = [1, 1]} : vector<16x32xf32> to vector<1x32xf32>
    %327 = vector.broadcast %326 : vector<1x32xf32> to vector<16x32xf32>
    %328 = arith.addf %325, %327 : vector<16x32xf32>
    %329 = arith.addf %328, %211 : vector<16x32xf32>
    %330 = vector.extract_strided_slice %0 {offsets = [9, 0], sizes = [1, 32], strides = [1, 1]} : vector<16x32xf32> to vector<1x32xf32>
    %331 = vector.extract_strided_slice %0 {offsets = [10, 0], sizes = [1, 32], strides = [1, 1]} : vector<16x32xf32> to vector<1x32xf32>
    %cst_76 = arith.constant dense<0.000000e+00> : vector<16xf32>
    %332 = vector.multi_reduction <add>, %329, %cst_76 [1] : vector<16x32xf32> to vector<16xf32>
    %333 = vector.shape_cast %332 : vector<16xf32> to vector<16x1xf32>
    %cst_77 = arith.constant 3.200000e+01 : f32
    %334 = vector.broadcast %cst_77 : f32 to vector<16x1xf32>
    %335 = arith.divf %333, %334 : vector<16x1xf32>
    %336 = vector.broadcast %335 : vector<16x1xf32> to vector<16x32xf32>
    %337 = arith.subf %329, %336 : vector<16x32xf32>
    %338 = arith.mulf %337, %337 : vector<16x32xf32>
    %cst_78 = arith.constant dense<0.000000e+00> : vector<16xf32>
    %339 = vector.multi_reduction <add>, %338, %cst_78 [1] : vector<16x32xf32> to vector<16xf32>
    %340 = vector.shape_cast %339 : vector<16xf32> to vector<16x1xf32>
    %cst_79 = arith.constant 3.200000e+01 : f32
    %341 = vector.broadcast %cst_79 : f32 to vector<16x1xf32>
    %342 = arith.divf %340, %341 : vector<16x1xf32>
    %cst_80 = arith.constant 9.99999996E-13 : f32
    %343 = vector.broadcast %cst_80 : f32 to vector<16x1xf32>
    %344 = arith.addf %342, %343 : vector<16x1xf32>
    %345 = math.rsqrt %344 : vector<16x1xf32>
    %346 = vector.broadcast %345 : vector<16x1xf32> to vector<16x32xf32>
    %347 = arith.mulf %337, %346 : vector<16x32xf32>
    %348 = vector.broadcast %330 : vector<1x32xf32> to vector<16x32xf32>
    %349 = arith.mulf %347, %348 : vector<16x32xf32>
    %350 = vector.broadcast %331 : vector<1x32xf32> to vector<16x32xf32>
    %351 = arith.addf %349, %350 : vector<16x32xf32>
    %352 = arith.truncf %351 : vector<16x32xf32> to vector<16x32xbf16>
    %cst_81 = arith.constant dense<0.000000e+00> : vector<16x64xf32>
    %353 = tpu.matmul %352, %216, %cst_81 {dimension_numbers = #tpu.dot_dimension_numbers<[1], [0], [0], [1], [0, 0, 1, 1], [], []>} : vector<16x32xbf16>, vector<32x64xbf16>, vector<16x64xf32> -> vector<16x64xf32>
    %354 = vector.extract_strided_slice %2 {offsets = [1, 0], sizes = [1, 64], strides = [1, 1]} : vector<2x64xf32> to vector<1x64xf32>
    %355 = vector.broadcast %354 : vector<1x64xf32> to vector<16x64xf32>
    %356 = arith.addf %353, %355 : vector<16x64xf32>
    %357 = arith.mulf %356, %356 : vector<16x64xf32>
    %358 = arith.mulf %356, %357 : vector<16x64xf32>
    %cst_82 = arith.constant 4.471500e-02 : f32
    %359 = vector.broadcast %cst_82 : f32 to vector<16x64xf32>
    %360 = arith.mulf %359, %358 : vector<16x64xf32>
    %361 = arith.addf %356, %360 : vector<16x64xf32>
    %cst_83 = arith.constant 0.797884583 : f32
    %362 = vector.broadcast %cst_83 : f32 to vector<16x64xf32>
    %363 = arith.mulf %362, %361 : vector<16x64xf32>
    %364 = math.tanh %363 : vector<16x64xf32>
    %cst_84 = arith.constant 1.000000e+00 : f32
    %365 = vector.broadcast %cst_84 : f32 to vector<16x64xf32>
    %366 = arith.addf %365, %364 : vector<16x64xf32>
    %cst_85 = arith.constant 5.000000e-01 : f32
    %367 = vector.broadcast %cst_85 : f32 to vector<16x64xf32>
    %368 = arith.mulf %367, %366 : vector<16x64xf32>
    %369 = arith.mulf %356, %368 : vector<16x64xf32>
    %370 = arith.truncf %369 : vector<16x64xf32> to vector<16x64xbf16>
    %cst_86 = arith.constant dense<0.000000e+00> : vector<16x32xf32>
    %371 = tpu.matmul %370, %217, %cst_86 {dimension_numbers = #tpu.dot_dimension_numbers<[1], [1], [0], [0], [0, 0, 1, 0], [], []>} : vector<16x64xbf16>, vector<32x64xbf16>, vector<16x32xf32> -> vector<16x32xf32>
    %372 = vector.extract_strided_slice %0 {offsets = [11, 0], sizes = [1, 32], strides = [1, 1]} : vector<16x32xf32> to vector<1x32xf32>
    %373 = vector.broadcast %372 : vector<1x32xf32> to vector<16x32xf32>
    %374 = arith.addf %371, %373 : vector<16x32xf32>
    %375 = arith.addf %374, %351 : vector<16x32xf32>
    %376 = vector.extract_strided_slice %0 {offsets = [12, 0], sizes = [1, 32], strides = [1, 1]} : vector<16x32xf32> to vector<1x32xf32>
    %377 = vector.extract_strided_slice %0 {offsets = [13, 0], sizes = [1, 32], strides = [1, 1]} : vector<16x32xf32> to vector<1x32xf32>
    %cst_87 = arith.constant dense<0.000000e+00> : vector<16xf32>
    %378 = vector.multi_reduction <add>, %375, %cst_87 [1] : vector<16x32xf32> to vector<16xf32>
    %379 = vector.shape_cast %378 : vector<16xf32> to vector<16x1xf32>
    %cst_88 = arith.constant 3.200000e+01 : f32
    %380 = vector.broadcast %cst_88 : f32 to vector<16x1xf32>
    %381 = arith.divf %379, %380 : vector<16x1xf32>
    %382 = vector.broadcast %381 : vector<16x1xf32> to vector<16x32xf32>
    %383 = arith.subf %375, %382 : vector<16x32xf32>
    %384 = arith.mulf %383, %383 : vector<16x32xf32>
    %cst_89 = arith.constant dense<0.000000e+00> : vector<16xf32>
    %385 = vector.multi_reduction <add>, %384, %cst_89 [1] : vector<16x32xf32> to vector<16xf32>
    %386 = vector.shape_cast %385 : vector<16xf32> to vector<16x1xf32>
    %cst_90 = arith.constant 3.200000e+01 : f32
    %387 = vector.broadcast %cst_90 : f32 to vector<16x1xf32>
    %388 = arith.divf %386, %387 : vector<16x1xf32>
    %cst_91 = arith.constant 9.99999996E-13 : f32
    %389 = vector.broadcast %cst_91 : f32 to vector<16x1xf32>
    %390 = arith.addf %388, %389 : vector<16x1xf32>
    %391 = math.rsqrt %390 : vector<16x1xf32>
    %392 = vector.broadcast %391 : vector<16x1xf32> to vector<16x32xf32>
    %393 = arith.mulf %383, %392 : vector<16x32xf32>
    %394 = vector.broadcast %376 : vector<1x32xf32> to vector<16x32xf32>
    %395 = arith.mulf %393, %394 : vector<16x32xf32>
    %396 = vector.broadcast %377 : vector<1x32xf32> to vector<16x32xf32>
    %397 = arith.addf %395, %396 : vector<16x32xf32>
    %398 = vector.extract_strided_slice %397 {offsets = [0, 0], sizes = [1, 32], strides = [1, 1]} : vector<16x32xf32> to vector<1x32xf32>
    %399 = vector.extract_strided_slice %397 {offsets = [8, 0], sizes = [1, 32], strides = [1, 1]} : vector<16x32xf32> to vector<1x32xf32>
    %400 = tpu.concatenate %398, %399 in 0 : vector<1x32xf32>, vector<1x32xf32> -> vector<2x32xf32>
    %c2 = arith.constant 2 : index
    %c0_92 = arith.constant 0 : index
    %c0_93 = arith.constant 0 : index
    %401 = vector.load %arg1[%c2, %c0_92, %c0_93] : memref<3x32x512xbf16, #tpu.memory_space<vmem>>, vector<1x32x512xbf16>
    %402 = vector.shape_cast %401 : vector<1x32x512xbf16> to vector<32x512xbf16>
    %403 = vector.extract_strided_slice %402 {offsets = [0, 0], sizes = [32, 32], strides = [1, 1]} : vector<32x512xbf16> to vector<32x32xbf16>
    %404 = vector.extract_strided_slice %402 {offsets = [0, 128], sizes = [32, 4], strides = [1, 1]} : vector<32x512xbf16> to vector<32x4xbf16>
    %405 = arith.truncf %400 : vector<2x32xf32> to vector<2x32xbf16>
    %cst_94 = arith.constant dense<0.000000e+00> : vector<2x32xf32>
    %406 = tpu.matmul %405, %403, %cst_94 {dimension_numbers = #tpu.dot_dimension_numbers<[1], [0], [0], [1], [0, 0, 1, 1], [], []>} : vector<2x32xbf16>, vector<32x32xbf16>, vector<2x32xf32> -> vector<2x32xf32>
    %407 = vector.extract_strided_slice %0 {offsets = [14, 0], sizes = [1, 32], strides = [1, 1]} : vector<16x32xf32> to vector<1x32xf32>
    %408 = vector.broadcast %407 : vector<1x32xf32> to vector<2x32xf32>
    %409 = arith.addf %406, %408 : vector<2x32xf32>
    %410 = math.tanh %409 : vector<2x32xf32>
    %411 = arith.truncf %410 : vector<2x32xf32> to vector<2x32xbf16>
    %cst_95 = arith.constant dense<0.000000e+00> : vector<2x4xf32>
    %412 = tpu.matmul %411, %404, %cst_95 {dimension_numbers = #tpu.dot_dimension_numbers<[1], [0], [0], [1], [0, 0, 1, 1], [], []>} : vector<2x32xbf16>, vector<32x4xbf16>, vector<2x4xf32> -> vector<2x4xf32>
    %413 = vector.extract_strided_slice %0 {offsets = [15, 0], sizes = [1, 4], strides = [1, 1]} : vector<16x32xf32> to vector<1x4xf32>
    %414 = vector.broadcast %413 : vector<1x4xf32> to vector<2x4xf32>
    %415 = arith.addf %412, %414 : vector<2x4xf32>
    %c0_96 = arith.constant 0 : index
    %c0_97 = arith.constant 0 : index
    %416 = vector.load %arg5[%c0_96, %c0_97] : memref<2x4xf32, #tpu.memory_space<vmem>>, vector<2x4xf32>
    tpu.vector_store %arg5[%c0_96, %c0_97], %415 {strides = array<i32>} : memref<2x4xf32, #tpu.memory_space<vmem>>, vector<2x4xf32>,
    return
  }
}

</mosaic_0001>

<llo_original>
// kernel: transformer_model_forward.1
$region0: #{transformer_model_forward.1}
  #allocation0 [shape = 'u32[]', space=smem, size = 0x4, offset = 0x4, fixed_abs, tag = 'smem constant byte address 0x4 - core index']
  #allocation1 [shape = 'u32[72,128]{1,0:T(1,128)}', space=vmem, size = 0x9000, scoped, tag = 'internal scratch']
  %s0 = inlined_call_operand.vmem [shape: f32[16,32], index: 0, kind: input, shape index: {}]
  %s1 = inlined_call_operand.vmem [shape: bf16[3,32,512], index: 1, kind: input, shape index: {}]
  %s2 = inlined_call_operand.vmem [shape: f32[16,32], index: 2, kind: input, shape index: {}]
  %s3 = inlined_call_operand.vmem [shape: f32[2,96], index: 3, kind: input, shape index: {}]
  %s4 = inlined_call_operand.vmem [shape: f32[2,64], index: 4, kind: input, shape index: {}]
  %s5 = inlined_call_operand.hbm [shape: f32[2,4], index: 5, kind: output, shape index: {}]
  %s6 = sld [smem:[#allocation0]]
  $region30: #{transformer_model_forward.1} parent=0
    _
  %s8 = ssub.s32 1, %s6
  %s9 = scalar_select 0, %s8, %s6
  $region1: #{transformer_model_forward.1} parent=0
    #allocation2 [shape = 'u8[1024]{0}', space=vmem, size = 0x400, scoped, tag = 'output window, operand 0, single buffered']
    #allocation3 [shape = 's32[1]{0}', space=sflag, size = 0x4, scoped, tag = 'scoped memory for transformer_model_forward.1']
    %10 = vsyncpa [#allocation3], 0
    // Predicated region
    $region2: #{transformer_model_forward.1} parent=1 // pred_check
      _
    $region3: #{transformer_model_forward.1} parent=1 // pred_check_branch
      %12 = sbr.rel (0) target = $region5
    $region4: #{transformer_model_forward.1} parent=1 // pred_region
      _
    $region5: #{transformer_model_forward.1} parent=1 // pred_fallthru
      _
    // Predicated region
    $region6: #{transformer_model_forward.1} parent=1 // pred_check
      _
    $region7: #{transformer_model_forward.1} parent=1 // pred_check_branch
      %14 = sbr.rel (0) target = $region9
    $region8: #{transformer_model_forward.1} parent=1 // pred_region
      _
    $region9: #{transformer_model_forward.1} parent=1 // pred_fallthru
      _
    // Predicated region
    $region10: #{transformer_model_forward.1} parent=1 // pred_check
      _
    $region11: #{transformer_model_forward.1} parent=1 // pred_check_branch
      %16 = sbr.rel (0) target = $region13
    $region12: #{transformer_model_forward.1} parent=1 // pred_region
      _
    $region13: #{transformer_model_forward.1} parent=1 // pred_fallthru
      _
    // Predicated region
    $region14: #{transformer_model_forward.1} parent=1 // pred_check
      _
    $region15: #{transformer_model_forward.1} parent=1 // pred_check_branch
      %18 = sbr.rel (0) target = $region17
    $region16: #{transformer_model_forward.1} parent=1 // pred_region
      _
    $region17: #{transformer_model_forward.1} parent=1 // pred_fallthru
      _
    // Predicated region
    $region18: #{transformer_model_forward.1} parent=1 // pred_check
      _
    $region19: #{transformer_model_forward.1} parent=1 // pred_check_branch
      %20 = sbr.rel (0) target = $region21
    $region20: #{transformer_model_forward.1} parent=1 // pred_region
      _
    $region21: #{transformer_model_forward.1} parent=1 // pred_fallthru
      _
    %v22 = vld [vmem:[%s2] sm:$0xff]
    %v23 = vld [vmem:[%s2 + $0x8] sm:$0xff]
    %v24 = vld [vmem:[%s3] sm:$0x3]
    %v25 = vld [vmem:[%s4] sm:$0x3]
    %v26 = vld [vmem:[%s0] sm:$0xff]
    %v27 = vld [vmem:[%s0 + $0x8] sm:$0xff]
    %vm28 = vcmask 261120
    %v29 = vsel %vm28, %v26, 0.0
    %30 = vadd.xlane.f32.xlu0 %v29
    %v31 = vpop.xlane.xlu0 %30
    %v32 = vsel %vm28, %v27, 0.0
    %33 = vadd.xlane.f32.xlu0 %v32
    %v34 = vpop.xlane.xlu0 %33
    %v35 = vrcp.pop 32.0
    %v36 = vmul.f32 32.0, %v35
    %v37 = vsub.f32 1.0, %v36
    %v38 = vmul.f32 %v35, %v37
    %v39 = vadd.f32 %v35, %v38
    %vm40 = vweird.f32 %v35
    %v41 = vsel %vm40, %v35, %v39
    %v42 = vmul.f32 %v31, %v41
    %v43 = vmul.f32 %v34, %v41
    %v44 = vsub.f32 %v26, %v42
    %v45 = vsub.f32 %v27, %v43
    %v46 = vmul.f32 %v44, %v44
    %v47 = vmul.f32 %v45, %v45
    %v48 = vsel %vm28, %v46, 0.0
    %49 = vadd.xlane.f32.xlu0 %v48
    %v50 = vpop.xlane.xlu0 %49
    %v51 = vsel %vm28, %v47, 0.0
    %52 = vadd.xlane.f32.xlu0 %v51
    %v53 = vpop.xlane.xlu0 %52
    %v54 = vmul.f32 %v50, %v41
    %v55 = vmul.f32 %v53, %v41
    %v56 = vadd.f32 %v54, 1e-12
    %v57 = vadd.f32 %v55, 1e-12
    %v58 = vrsqrt.pop %v56
    %v59 = vmul.f32 %v58, %v56
    %v60 = vmul.f32 %v59, %v58
    %v61 = vmul.f32 0.5, %v60
    %v62 = vsub.f32 1.5, %v61
    %v63 = vmul.f32 %v58, %v62
    %vm64 = vweird.f32 %v56
    %vm65 = vweird.f32 %v58
    %vm66 = vmor %vm64, %vm65
    %v67 = vsel %vm66, %v58, %v63
    %v68 = vrsqrt.pop %v57
    %v69 = vmul.f32 %v68, %v57
    %v70 = vmul.f32 %v69, %v68
    %v71 = vmul.f32 0.5, %v70
    %v72 = vsub.f32 1.5, %v71
    %v73 = vmul.f32 %v68, %v72
    %vm74 = vweird.f32 %v57
    %vm75 = vweird.f32 %v68
    %vm76 = vmor %vm74, %vm75
    %v77 = vsel %vm76, %v68, %v73
    %v78 = vmul.f32 %v44, %v67
    %v79 = vmul.f32 %v45, %v77
    %v80 = vperm.slane %v22, 0
    %v81 = vmul.f32 %v78, %v80
    %v82 = vmul.f32 %v79, %v80
    %v83 = vperm.slane %v22, 1
    %v84 = vadd.f32 %v81, %v83
    %v85 = vadd.f32 %v82, %v83
    %v86 = vld [vmem:[%s1] sm:$0xff]
    %v87 = vld [vmem:[%s1 + $0x8] sm:$0xff]
    %v88 = vld [vmem:[%s1 + $0x10] sm:$0xff]
    %v89 = vld [vmem:[%s1 + $0x18] sm:$0xff]
    %v90 = vld [vmem:[%s1 + $0x20] sm:$0xff]
    %v91 = vld [vmem:[%s1 + $0x28] sm:$0xff]
    %v92 = vld [vmem:[%s1 + $0x30] sm:$0xff]
    %v93 = vld [vmem:[%s1 + $0x38] sm:$0xff]
    %v94 = vpack.c.bf16 %v85, %v84
    %v95 = vperm.slane %v24, 0
    %v100 = vunpack.c.l.b16 %v86
    %v101 = vunpack.c.l.b16 %v88
    %v102 = vunpack.c.l.b16 %v90
    %v103 = vunpack.c.l.b16 %v92
    %v104 = vpack.c.b16 %v101, %v100
    %v105 = vpack.c.b16 %v103, %v102
    %v109 = vsel %vm28, %v94, 0
    %111 = vmatpush.bf16.msra.mxu0 0
    %112 = vmatpush.bf16.msra.mxu0 0
    %113 = vmatpush.bf16.msra.mxu0 0
    %114 = vmatpush.bf16.msra.mxu0 0
    %115 = vmatpush.bf16.msra.mxu0 0
    %116 = vmatpush.bf16.msra.mxu0 0
    %117 = vmatpush.bf16.msra.mxu0 %v105
    %118 = vmatpush.bf16.msra.mxu0 %v104
    %119 = vmatmul.bf16.gmra.mxu0 %v109
    %v120 = vpop.f32.mrf.mxu0
    %v121 = vadd.f32 %v95, %v120
    %v122 = vpop.f32.mrf.mxu0
    %v123 = vadd.f32 %v95, %v122
    %124 = vdwg.mxu0
    %v125 = vpack.c.bf16 %v121, %v121
    %v126 = vpack.c.bf16 %v123, %v123
    %v128 = vunpack.c.l.b16 %v125
    %v129 = vpack.c.b16 %v128, %v128
    %130 = vrot.lane.b32.xlu0 %v129, 96
    %v131 = vpop.permute.xlu0 %130
    %vm132 = vcmask 64512
    %v134 = vsel %vm132, %v125, 0
    %v137 = vsel %vm132, %v131, 0
    %139 = vmatpush.bf16.xpose.msra.mxu0 0
    %140 = vmatpush.bf16.xpose.msra.mxu0 0
    %141 = vmatpush.bf16.xpose.msra.mxu0 0
    %142 = vmatpush.bf16.xpose.msra.mxu0 0
    %143 = vmatpush.bf16.xpose.msra.mxu0 0
    %144 = vmatpush.bf16.xpose.msra.mxu0 0
    %145 = vmatpush.bf16.xpose.msra.mxu0 0
    %146 = vmatpush.bf16.xpose.msra.mxu0 %v137
    %147 = vmatmul.bf16.gmra.mxu0 %v134
    %v148 = vpop.f32.mrf.mxu0
    %v149 = vadd.f32 0.0, %v148
    %v150 = vpop.f32.mrf.mxu0
    %151 = vdwg.mxu0
    %v153 = vunpack.c.l.b16 %v126
    %v154 = vpack.c.b16 %v153, %v153
    %155 = vrot.lane.b32.xlu0 %v154, 96
    %v156 = vpop.permute.xlu0 %155
    %v158 = vsel %vm132, %v126, 0
    %v161 = vsel %vm132, %v156, 0
    %163 = vmatpush.bf16.xpose.msra.mxu0 0
    %164 = vmatpush.bf16.xpose.msra.mxu0 0
    %165 = vmatpush.bf16.xpose.msra.mxu0 0
    %166 = vmatpush.bf16.xpose.msra.mxu0 0
    %167 = vmatpush.bf16.xpose.msra.mxu0 0
    %168 = vmatpush.bf16.xpose.msra.mxu0 0
    %169 = vmatpush.bf16.xpose.msra.mxu0 0
    %170 = vmatpush.bf16.xpose.msra.mxu0 %v161
    %171 = vmatmul.bf16.gmra.mxu0 %v158
    %v172 = vpop.f32.mrf.mxu0
    %v173 = vadd.f32 0.0, %v172
    %v174 = vpop.f32.mrf.mxu0
    %175 = vdwg.mxu0
    %v176 = vmul.f32 %v149, 0.35355338
    %v177 = vmul.f32 %v173, 0.35355338
    %v178 = vsel %vm132, %v176, -inf
    %179 = vmax.xlane.f32.xlu0 %v178
    %v180 = vpop.xlane.xlu0 %179
    %v181 = vsel %vm132, %v177, -inf
    %182 = vmax.xlane.f32.xlu0 %v181
    %v183 = vpop.xlane.xlu0 %182
    %v184 = vsub.f32 %v176, %v180
    %v185 = vsub.f32 %v177, %v183
    %v186 = vmul.f32 %v184, 1.442695
    %v187 = vpow.pop %v186
    %v188 = vmul.f32 %v185, 1.442695
    %v189 = vpow.pop %v188
    %v190 = vsel %vm132, %v187, 0.0
    %191 = vadd.xlane.f32.xlu0 %v190
    %v192 = vpop.xlane.xlu0 %191
    %v193 = vsel %vm132, %v189, 0.0
    %194 = vadd.xlane.f32.xlu0 %v193
    %v195 = vpop.xlane.xlu0 %194
    %v196 = vrcp.pop %v192
    %v197 = vrcp.pop %v195
    %v198 = vmul.f32 %v187, %v196
    %v199 = vmul.f32 %v189, %v197
    %v200 = vpack.c.bf16 %v198, %v198
    %v201 = vpack.c.bf16 %v199, %v199
    %202 = vrot.lane.b32.xlu0 %v129, 64
    %v203 = vpop.permute.xlu0 %202
    %v205 = vsel %vm132, %v200, 0
    %vm207 = vcmask 1043456
    %v209 = vsel %vm207, %v203, 0
    %211 = vmatpush.bf16.msra.mxu0 0
    %212 = vmatpush.bf16.msra.mxu0 0
    %213 = vmatpush.bf16.msra.mxu0 0
    %214 = vmatpush.bf16.msra.mxu0 0
    %215 = vmatpush.bf16.msra.mxu0 0
    %216 = vmatpush.bf16.msra.mxu0 0
    %217 = vmatpush.bf16.msra.mxu0 0
    %218 = vmatpush.bf16.msra.mxu0 %v209
    %219 = vmatmul.bf16.gmra.mxu0 %v205
    %v220 = vpop.f32.mrf.mxu0
    %v221 = vadd.f32 0.0, %v220
    %v222 = vpop.f32.mrf.mxu0
    %223 = vdwg.mxu0
    %224 = vrot.lane.b32.xlu0 %v154, 64
    %v225 = vpop.permute.xlu0 %224
    %v227 = vsel %vm132, %v201, 0
    %v230 = vsel %vm207, %v225, 0
    %232 = vmatpush.bf16.msra.mxu0 0
    %233 = vmatpush.bf16.msra.mxu0 0
    %234 = vmatpush.bf16.msra.mxu0 0
    %235 = vmatpush.bf16.msra.mxu0 0
    %236 = vmatpush.bf16.msra.mxu0 0
    %237 = vmatpush.bf16.msra.mxu0 0
    %238 = vmatpush.bf16.msra.mxu0 0
    %239 = vmatpush.bf16.msra.mxu0 %v230
    %240 = vmatmul.bf16.gmra.mxu0 %v227
    %v241 = vpop.f32.mrf.mxu0
    %v242 = vadd.f32 0.0, %v241
    %v243 = vpop.f32.mrf.mxu0
    %244 = vdwg.mxu0
    %245 = vrot.lane.b32.xlu0 %v129, 120
    %v246 = vpop.permute.xlu0 %245
    %247 = vrot.lane.b32.xlu0 %v129, 88
    %v248 = vpop.permute.xlu0 %247
    %v250 = vsel %vm132, %v246, 0
    %v253 = vsel %vm132, %v248, 0
    %255 = vmatpush.bf16.xpose.msra.mxu0 0
    %256 = vmatpush.bf16.xpose.msra.mxu0 0
    %257 = vmatpush.bf16.xpose.msra.mxu0 0
    %258 = vmatpush.bf16.xpose.msra.mxu0 0
    %259 = vmatpush.bf16.xpose.msra.mxu0 0
    %260 = vmatpush.bf16.xpose.msra.mxu0 0
    %261 = vmatpush.bf16.xpose.msra.mxu0 0
    %262 = vmatpush.bf16.xpose.msra.mxu0 %v253
    %263 = vmatmul.bf16.gmra.mxu0 %v250
    %v264 = vpop.f32.mrf.mxu0
    %v265 = vadd.f32 0.0, %v264
    %v266 = vpop.f32.mrf.mxu0
    %267 = vdwg.mxu0
    %268 = vrot.lane.b32.xlu0 %v154, 120
    %v269 = vpop.permute.xlu0 %268
    %270 = vrot.lane.b32.xlu0 %v154, 88
    %v271 = vpop.permute.xlu0 %270
    %v273 = vsel %vm132, %v269, 0
    %v276 = vsel %vm132, %v271, 0
    %278 = vmatpush.bf16.xpose.msra.mxu0 0
    %279 = vmatpush.bf16.xpose.msra.mxu0 0
    %280 = vmatpush.bf16.xpose.msra.mxu0 0
    %281 = vmatpush.bf16.xpose.msra.mxu0 0
    %282 = vmatpush.bf16.xpose.msra.mxu0 0
    %283 = vmatpush.bf16.xpose.msra.mxu0 0
    %284 = vmatpush.bf16.xpose.msra.mxu0 0
    %285 = vmatpush.bf16.xpose.msra.mxu0 %v276
    %286 = vmatmul.bf16.gmra.mxu0 %v273
    %v287 = vpop.f32.mrf.mxu0
    %v288 = vadd.f32 0.0, %v287
    %v289 = vpop.f32.mrf.mxu0
    %290 = vdwg.mxu0
    %v291 = vmul.f32 %v265, 0.35355338
    %v292 = vmul.f32 %v288, 0.35355338
    %v293 = vsel %vm132, %v291, -inf
    %294 = vmax.xlane.f32.xlu0 %v293
    %v295 = vpop.xlane.xlu0 %294
    %v296 = vsel %vm132, %v292, -inf
    %297 = vmax.xlane.f32.xlu0 %v296
    %v298 = vpop.xlane.xlu0 %297
    %v299 = vsub.f32 %v291, %v295
    %v300 = vsub.f32 %v292, %v298
    %v301 = vmul.f32 %v299, 1.442695
    %v302 = vpow.pop %v301
    %v303 = vmul.f32 %v300, 1.442695
    %v304 = vpow.pop %v303
    %v305 = vsel %vm132, %v302, 0.0
    %306 = vadd.xlane.f32.xlu0 %v305
    %v307 = vpop.xlane.xlu0 %306
    %v308 = vsel %vm132, %v304, 0.0
    %309 = vadd.xlane.f32.xlu0 %v308
    %v310 = vpop.xlane.xlu0 %309
    %v311 = vrcp.pop %v307
    %v312 = vrcp.pop %v310
    %v313 = vmul.f32 %v302, %v311
    %v314 = vmul.f32 %v304, %v312
    %v315 = vpack.c.bf16 %v313, %v313
    %v316 = vpack.c.bf16 %v314, %v314
    %317 = vrot.lane.b32.xlu0 %v129, 56
    %v318 = vpop.permute.xlu0 %317
    %v320 = vsel %vm132, %v315, 0
    %v323 = vsel %vm207, %v318, 0
    %325 = vmatpush.bf16.msra.mxu0 0
    %326 = vmatpush.bf16.msra.mxu0 0
    %327 = vmatpush.bf16.msra.mxu0 0
    %328 = vmatpush.bf16.msra.mxu0 0
    %329 = vmatpush.bf16.msra.mxu0 0
    %330 = vmatpush.bf16.msra.mxu0 0
    %331 = vmatpush.bf16.msra.mxu0 0
    %332 = vmatpush.bf16.msra.mxu0 %v323
    %333 = vmatmul.bf16.gmra.mxu0 %v320
    %v334 = vpop.f32.mrf.mxu0
    %v335 = vadd.f32 0.0, %v334
    %v336 = vpop.f32.mrf.mxu0
    %337 = vdwg.mxu0
    %338 = vrot.lane.b32.xlu0 %v154, 56
    %v339 = vpop.permute.xlu0 %338
    %v341 = vsel %vm132, %v316, 0
    %v344 = vsel %vm207, %v339, 0
    %346 = vmatpush.bf16.msra.mxu0 0
    %347 = vmatpush.bf16.msra.mxu0 0
    %348 = vmatpush.bf16.msra.mxu0 0
    %349 = vmatpush.bf16.msra.mxu0 0
    %350 = vmatpush.bf16.msra.mxu0 0
    %351 = vmatpush.bf16.msra.mxu0 0
    %352 = vmatpush.bf16.msra.mxu0 0
    %353 = vmatpush.bf16.msra.mxu0 %v344
    %354 = vmatmul.bf16.gmra.mxu0 %v341
    %v355 = vpop.f32.mrf.mxu0
    %v356 = vadd.f32 0.0, %v355
    %v357 = vpop.f32.mrf.mxu0
    %358 = vdwg.mxu0
    %359 = vrot.lane.b32.xlu0 %v129, 112
    %v360 = vpop.permute.xlu0 %359
    %361 = vrot.lane.b32.xlu0 %v129, 80
    %v362 = vpop.permute.xlu0 %361
    %v364 = vsel %vm132, %v360, 0
    %v367 = vsel %vm132, %v362, 0
    %369 = vmatpush.bf16.xpose.msra.mxu0 0
    %370 = vmatpush.bf16.xpose.msra.mxu0 0
    %371 = vmatpush.bf16.xpose.msra.mxu0 0
    %372 = vmatpush.bf16.xpose.msra.mxu0 0
    %373 = vmatpush.bf16.xpose.msra.mxu0 0
    %374 = vmatpush.bf16.xpose.msra.mxu0 0
    %375 = vmatpush.bf16.xpose.msra.mxu0 0
    %376 = vmatpush.bf16.xpose.msra.mxu0 %v367
    %377 = vmatmul.bf16.gmra.mxu0 %v364
    %v378 = vpop.f32.mrf.mxu0
    %v379 = vadd.f32 0.0, %v378
    %v380 = vpop.f32.mrf.mxu0
    %381 = vdwg.mxu0
    %382 = vrot.lane.b32.xlu0 %v154, 112
    %v383 = vpop.permute.xlu0 %382
    %384 = vrot.lane.b32.xlu0 %v154, 80
    %v385 = vpop.permute.xlu0 %384
    %v387 = vsel %vm132, %v383, 0
    %v390 = vsel %vm132, %v385, 0
    %392 = vmatpush.bf16.xpose.msra.mxu0 0
    %393 = vmatpush.bf16.xpose.msra.mxu0 0
    %394 = vmatpush.bf16.xpose.msra.mxu0 0
    %395 = vmatpush.bf16.xpose.msra.mxu0 0
    %396 = vmatpush.bf16.xpose.msra.mxu0 0
    %397 = vmatpush.bf16.xpose.msra.mxu0 0
    %398 = vmatpush.bf16.xpose.msra.mxu0 0
    %399 = vmatpush.bf16.xpose.msra.mxu0 %v390
    %400 = vmatmul.bf16.gmra.mxu0 %v387
    %v401 = vpop.f32.mrf.mxu0
    %v402 = vadd.f32 0.0, %v401
    %v403 = vpop.f32.mrf.mxu0
    %404 = vdwg.mxu0
    %v405 = vmul.f32 %v379, 0.35355338
    %v406 = vmul.f32 %v402, 0.35355338
    %v407 = vsel %vm132, %v405, -inf
    %408 = vmax.xlane.f32.xlu0 %v407
    %v409 = vpop.xlane.xlu0 %408
    %v410 = vsel %vm132, %v406, -inf
    %411 = vmax.xlane.f32.xlu0 %v410
    %v412 = vpop.xlane.xlu0 %411
    %v413 = vsub.f32 %v405, %v409
    %v414 = vsub.f32 %v406, %v412
    %v415 = vmul.f32 %v413, 1.442695
    %v416 = vpow.pop %v415
    %v417 = vmul.f32 %v414, 1.442695
    %v418 = vpow.pop %v417
    %v419 = vsel %vm132, %v416, 0.0
    %420 = vadd.xlane.f32.xlu0 %v419
    %v421 = vpop.xlane.xlu0 %420
    %v422 = vsel %vm132, %v418, 0.0
    %423 = vadd.xlane.f32.xlu0 %v422
    %v424 = vpop.xlane.xlu0 %423
    %v425 = vrcp.pop %v421
    %v426 = vrcp.pop %v424
    %v427 = vmul.f32 %v416, %v425
    %v428 = vmul.f32 %v418, %v426
    %v429 = vpack.c.bf16 %v427, %v427
    %v430 = vpack.c.bf16 %v428, %v428
    %431 = vrot.lane.b32.xlu0 %v129, 48
    %v432 = vpop.permute.xlu0 %431
    %v434 = vsel %vm132, %v429, 0
    %v437 = vsel %vm207, %v432, 0
    %439 = vmatpush.bf16.msra.mxu0 0
    %440 = vmatpush.bf16.msra.mxu0 0
    %441 = vmatpush.bf16.msra.mxu0 0
    %442 = vmatpush.bf16.msra.mxu0 0
    %443 = vmatpush.bf16.msra.mxu0 0
    %444 = vmatpush.bf16.msra.mxu0 0
    %445 = vmatpush.bf16.msra.mxu0 0
    %446 = vmatpush.bf16.msra.mxu0 %v437
    %447 = vmatmul.bf16.gmra.mxu0 %v434
    %v448 = vpop.f32.mrf.mxu0
    %v449 = vadd.f32 0.0, %v448
    %v450 = vpop.f32.mrf.mxu0
    %451 = vdwg.mxu0
    %452 = vrot.lane.b32.xlu0 %v154, 48
    %v453 = vpop.permute.xlu0 %452
    %v455 = vsel %vm132, %v430, 0
    %v458 = vsel %vm207, %v453, 0
    %460 = vmatpush.bf16.msra.mxu0 0
    %461 = vmatpush.bf16.msra.mxu0 0
    %462 = vmatpush.bf16.msra.mxu0 0
    %463 = vmatpush.bf16.msra.mxu0 0
    %464 = vmatpush.bf16.msra.mxu0 0
    %465 = vmatpush.bf16.msra.mxu0 0
    %466 = vmatpush.bf16.msra.mxu0 0
    %467 = vmatpush.bf16.msra.mxu0 %v458
    %468 = vmatmul.bf16.gmra.mxu0 %v455
    %v469 = vpop.f32.mrf.mxu0
    %v470 = vadd.f32 0.0, %v469
    %v471 = vpop.f32.mrf.mxu0
    %472 = vdwg.mxu0
    %473 = vrot.lane.b32.xlu0 %v129, 104
    %v474 = vpop.permute.xlu0 %473
    %475 = vrot.lane.b32.xlu0 %v129, 72
    %v476 = vpop.permute.xlu0 %475
    %v478 = vsel %vm132, %v474, 0
    %v481 = vsel %vm132, %v476, 0
    %483 = vmatpush.bf16.xpose.msra.mxu0 0
    %484 = vmatpush.bf16.xpose.msra.mxu0 0
    %485 = vmatpush.bf16.xpose.msra.mxu0 0
    %486 = vmatpush.bf16.xpose.msra.mxu0 0
    %487 = vmatpush.bf16.xpose.msra.mxu0 0
    %488 = vmatpush.bf16.xpose.msra.mxu0 0
    %489 = vmatpush.bf16.xpose.msra.mxu0 0
    %490 = vmatpush.bf16.xpose.msra.mxu0 %v481
    %491 = vmatmul.bf16.gmra.mxu0 %v478
    %v492 = vpop.f32.mrf.mxu0
    %v493 = vadd.f32 0.0, %v492
    %v494 = vpop.f32.mrf.mxu0
    %495 = vdwg.mxu0
    %496 = vrot.lane.b32.xlu0 %v154, 104
    %v497 = vpop.permute.xlu0 %496
    %498 = vrot.lane.b32.xlu0 %v154, 72
    %v499 = vpop.permute.xlu0 %498
    %v501 = vsel %vm132, %v497, 0
    %v504 = vsel %vm132, %v499, 0
    %506 = vmatpush.bf16.xpose.msra.mxu0 0
    %507 = vmatpush.bf16.xpose.msra.mxu0 0
    %508 = vmatpush.bf16.xpose.msra.mxu0 0
    %509 = vmatpush.bf16.xpose.msra.mxu0 0
    %510 = vmatpush.bf16.xpose.msra.mxu0 0
    %511 = vmatpush.bf16.xpose.msra.mxu0 0
    %512 = vmatpush.bf16.xpose.msra.mxu0 0
    %513 = vmatpush.bf16.xpose.msra.mxu0 %v504
    %514 = vmatmul.bf16.gmra.mxu0 %v501
    %v515 = vpop.f32.mrf.mxu0
    %v516 = vadd.f32 0.0, %v515
    %v517 = vpop.f32.mrf.mxu0
    %518 = vdwg.mxu0
    %v519 = vmul.f32 %v493, 0.35355338
    %v520 = vmul.f32 %v516, 0.35355338
    %v521 = vsel %vm132, %v519, -inf
    %522 = vmax.xlane.f32.xlu0 %v521
    %v523 = vpop.xlane.xlu0 %522
    %v524 = vsel %vm132, %v520, -inf
    %525 = vmax.xlane.f32.xlu0 %v524
    %v526 = vpop.xlane.xlu0 %525
    %v527 = vsub.f32 %v519, %v523
    %v528 = vsub.f32 %v520, %v526
    %v529 = vmul.f32 %v527, 1.442695
    %v530 = vpow.pop %v529
    %v531 = vmul.f32 %v528, 1.442695
    %v532 = vpow.pop %v531
    %v533 = vsel %vm132, %v530, 0.0
    %534 = vadd.xlane.f32.xlu0 %v533
    %v535 = vpop.xlane.xlu0 %534
    %v536 = vsel %vm132, %v532, 0.0
    %537 = vadd.xlane.f32.xlu0 %v536
    %v538 = vpop.xlane.xlu0 %537
    %v539 = vrcp.pop %v535
    %v540 = vrcp.pop %v538
    %v541 = vmul.f32 %v530, %v539
    %v542 = vmul.f32 %v532, %v540
    %v543 = vpack.c.bf16 %v541, %v541
    %v544 = vpack.c.bf16 %v542, %v542
    %545 = vrot.lane.b32.xlu0 %v129, 40
    %v546 = vpop.permute.xlu0 %545
    %v548 = vsel %vm132, %v543, 0
    %v551 = vsel %vm207, %v546, 0
    %553 = vmatpush.bf16.msra.mxu0 0
    %554 = vmatpush.bf16.msra.mxu0 0
    %555 = vmatpush.bf16.msra.mxu0 0
    %556 = vmatpush.bf16.msra.mxu0 0
    %557 = vmatpush.bf16.msra.mxu0 0
    %558 = vmatpush.bf16.msra.mxu0 0
    %559 = vmatpush.bf16.msra.mxu0 0
    %560 = vmatpush.bf16.msra.mxu0 %v551
    %561 = vmatmul.bf16.gmra.mxu0 %v548
    %v562 = vpop.f32.mrf.mxu0
    %v563 = vadd.f32 0.0, %v562
    %v564 = vpop.f32.mrf.mxu0
    %565 = vdwg.mxu0
    %566 = vrot.lane.b32.xlu0 %v154, 40
    %v567 = vpop.permute.xlu0 %566
    %v569 = vsel %vm132, %v544, 0
    %v572 = vsel %vm207, %v567, 0
    %574 = vmatpush.bf16.msra.mxu0 0
    %575 = vmatpush.bf16.msra.mxu0 0
    %576 = vmatpush.bf16.msra.mxu0 0
    %577 = vmatpush.bf16.msra.mxu0 0
    %578 = vmatpush.bf16.msra.mxu0 0
    %579 = vmatpush.bf16.msra.mxu0 0
    %580 = vmatpush.bf16.msra.mxu0 0
    %581 = vmatpush.bf16.msra.mxu0 %v572
    %582 = vmatmul.bf16.gmra.mxu0 %v569
    %v583 = vpop.f32.mrf.mxu0
    %v584 = vadd.f32 0.0, %v583
    %v585 = vpop.f32.mrf.mxu0
    %586 = vdwg.mxu0
    %589 = vrot.lane.b32.xlu0 %v335, 8
    %v590 = vpop.permute.xlu0 %589
    %591 = vrot.lane.b32.xlu0 %v356, 8
    %v592 = vpop.permute.xlu0 %591
    %597 = vrot.lane.b32.xlu0 %v449, 16
    %v598 = vpop.permute.xlu0 %597
    %599 = vrot.lane.b32.xlu0 %v470, 16
    %v600 = vpop.permute.xlu0 %599
    %605 = vrot.lane.b32.xlu0 %v563, 24
    %v606 = vpop.permute.xlu0 %605
    %607 = vrot.lane.b32.xlu0 %v584, 24
    %v608 = vpop.permute.xlu0 %607
    %v611 = vsel %vm132, %v221, %v590
    %v612 = vsel %vm132, %v242, %v592
    %vm613 = vcmask 130048
    %v614 = vsel %vm613, %v611, %v598
    %v615 = vsel %vm613, %v612, %v600
    %vm616 = vcmask 195584
    %v617 = vsel %vm616, %v614, %v606
    %v618 = vsel %vm616, %v615, %v608
    %v619 = vpack.c.bf16 %v618, %v617
    %v620 = vperm.slane %v22, 2
    %v621 = vunpack.c.h.b16 %v86
    %v622 = vunpack.c.h.b16 %v88
    %v623 = vunpack.c.h.b16 %v90
    %v624 = vunpack.c.h.b16 %v92
    %v625 = vpack.c.b16 %v622, %v621
    %v626 = vpack.c.b16 %v624, %v623
    %v630 = vsel %vm28, %v619, 0
    %632 = vmatpush.bf16.msra.mxu0 0
    %633 = vmatpush.bf16.msra.mxu0 0
    %634 = vmatpush.bf16.msra.mxu0 0
    %635 = vmatpush.bf16.msra.mxu0 0
    %636 = vmatpush.bf16.msra.mxu0 0
    %637 = vmatpush.bf16.msra.mxu0 0
    %638 = vmatpush.bf16.msra.mxu0 %v626
    %639 = vmatpush.bf16.msra.mxu0 %v625
    %640 = vmatmul.bf16.gmra.mxu0 %v630
    %v641 = vpop.f32.mrf.mxu0
    %v642 = vadd.f32 %v620, %v641
    %v643 = vpop.f32.mrf.mxu0
    %v644 = vadd.f32 %v620, %v643
    %645 = vdwg.mxu0
    %v646 = vadd.f32 %v642, %v84
    %v647 = vadd.f32 %v644, %v85
    %v648 = vsel %vm28, %v646, 0.0
    %649 = vadd.xlane.f32.xlu0 %v648
    %v650 = vpop.xlane.xlu0 %649
    %v651 = vsel %vm28, %v647, 0.0
    %652 = vadd.xlane.f32.xlu0 %v651
    %v653 = vpop.xlane.xlu0 %652
    %v654 = vmul.f32 %v650, %v41
    %v655 = vmul.f32 %v653, %v41
    %v656 = vsub.f32 %v646, %v654
    %v657 = vsub.f32 %v647, %v655
    %v658 = vmul.f32 %v656, %v656
    %v659 = vmul.f32 %v657, %v657
    %v660 = vsel %vm28, %v658, 0.0
    %661 = vadd.xlane.f32.xlu0 %v660
    %v662 = vpop.xlane.xlu0 %661
    %v663 = vsel %vm28, %v659, 0.0
    %664 = vadd.xlane.f32.xlu0 %v663
    %v665 = vpop.xlane.xlu0 %664
    %v666 = vmul.f32 %v662, %v41
    %v667 = vmul.f32 %v665, %v41
    %v668 = vadd.f32 %v666, 1e-12
    %v669 = vadd.f32 %v667, 1e-12
    %v670 = vrsqrt.pop %v668
    %v671 = vmul.f32 %v670, %v668
    %v672 = vmul.f32 %v671, %v670
    %v673 = vmul.f32 0.5, %v672
    %v674 = vsub.f32 1.5, %v673
    %v675 = vmul.f32 %v670, %v674
    %vm676 = vweird.f32 %v668
    %vm677 = vweird.f32 %v670
    %vm678 = vmor %vm676, %vm677
    %v679 = vsel %vm678, %v670, %v675
    %v680 = vrsqrt.pop %v669
    %v681 = vmul.f32 %v680, %v669
    %v682 = vmul.f32 %v681, %v680
    %v683 = vmul.f32 0.5, %v682
    %v684 = vsub.f32 1.5, %v683
    %v685 = vmul.f32 %v680, %v684
    %vm686 = vweird.f32 %v669
    %vm687 = vweird.f32 %v680
    %vm688 = vmor %vm686, %vm687
    %v689 = vsel %vm688, %v680, %v685
    %v690 = vmul.f32 %v656, %v679
    %v691 = vmul.f32 %v657, %v689
    %v692 = vperm.slane %v22, 3
    %v693 = vmul.f32 %v690, %v692
    %v694 = vmul.f32 %v691, %v692
    %v695 = vperm.slane %v22, 4
    %v696 = vadd.f32 %v693, %v695
    %v697 = vadd.f32 %v694, %v695
    %v698 = vpack.c.bf16 %v697, %v696
    %v699 = vperm.slane %v25, 0
    %v704 = vunpack.c.l.b16 %v87
    %v705 = vunpack.c.l.b16 %v89
    %v706 = vunpack.c.l.b16 %v91
    %v707 = vunpack.c.l.b16 %v93
    %v708 = vpack.c.b16 %v705, %v704
    %v709 = vpack.c.b16 %v707, %v706
    %v713 = vsel %vm28, %v698, 0
    %715 = vmatpush.bf16.msra.mxu0 0
    %716 = vmatpush.bf16.msra.mxu0 0
    %717 = vmatpush.bf16.msra.mxu0 0
    %718 = vmatpush.bf16.msra.mxu0 0
    %719 = vmatpush.bf16.msra.mxu0 0
    %720 = vmatpush.bf16.msra.mxu0 0
    %721 = vmatpush.bf16.msra.mxu0 %v709
    %722 = vmatpush.bf16.msra.mxu0 %v708
    %723 = vmatmul.bf16.gmra.mxu0 %v713
    %v724 = vpop.f32.mrf.mxu0
    %v725 = vadd.f32 %v699, %v724
    %v726 = vpop.f32.mrf.mxu0
    %v727 = vadd.f32 %v699, %v726
    %728 = vdwg.mxu0
    %v729 = vmul.f32 %v725, %v725
    %v730 = vmul.f32 %v727, %v727
    %v731 = vmul.f32 %v725, %v729
    %v732 = vmul.f32 %v727, %v730
    %v733 = vmul.f32 %v731, 0.044715
    %v734 = vmul.f32 %v732, 0.044715
    %v735 = vadd.f32 %v725, %v733
    %v736 = vadd.f32 %v727, %v734
    %v737 = vmul.f32 %v735, 0.7978846
    %v738 = vmul.f32 %v736, 0.7978846
    %v739 = vtanh.pop %v737
    %v740 = vtanh.pop %v738
    %v741 = vadd.f32 %v739, 1.0
    %v742 = vadd.f32 %v740, 1.0
    %v743 = vmul.f32 %v741, 0.5
    %v744 = vmul.f32 %v742, 0.5
    %v745 = vmul.f32 %v725, %v743
    %v746 = vmul.f32 %v727, %v744
    %v747 = vpack.c.bf16 %v746, %v745
    %v748 = vperm.slane %v22, 5
    %v749 = vunpack.c.h.b16 %v87
    %v750 = vunpack.c.h.b16 %v89
    %v751 = vunpack.c.h.b16 %v91
    %v752 = vunpack.c.h.b16 %v93
    %v753 = vpack.c.b16 %v750, %v749
    %v754 = vpack.c.b16 %v752, %v751
    %vm755 = vcmask 523264
    %v757 = vsel %vm755, %v747, 0
    %v760 = vsel %vm755, %v753, 0
    %v763 = vsel %vm755, %v754, 0
    %765 = vmatpush.bf16.xpose.msra.mxu0 0
    %766 = vmatpush.bf16.xpose.msra.mxu0 0
    %767 = vmatpush.bf16.xpose.msra.mxu0 0
    %768 = vmatpush.bf16.xpose.msra.mxu0 0
    %769 = vmatpush.bf16.xpose.msra.mxu0 0
    %770 = vmatpush.bf16.xpose.msra.mxu0 0
    %771 = vmatpush.bf16.xpose.msra.mxu0 %v763
    %772 = vmatpush.bf16.xpose.msra.mxu0 %v760
    %773 = vmatmul.bf16.gmra.mxu0 %v757
    %v774 = vpop.f32.mrf.mxu0
    %v775 = vadd.f32 %v748, %v774
    %v776 = vpop.f32.mrf.mxu0
    %v777 = vadd.f32 %v748, %v776
    %778 = vdwg.mxu0
    %v779 = vadd.f32 %v775, %v696
    %v780 = vadd.f32 %v777, %v697
    %v781 = vsel %vm28, %v779, 0.0
    %782 = vadd.xlane.f32.xlu0 %v781
    %v783 = vpop.xlane.xlu0 %782
    %v784 = vsel %vm28, %v780, 0.0
    %785 = vadd.xlane.f32.xlu0 %v784
    %v786 = vpop.xlane.xlu0 %785
    %v787 = vmul.f32 %v783, %v41
    %v788 = vmul.f32 %v786, %v41
    %v789 = vsub.f32 %v779, %v787
    %v790 = vsub.f32 %v780, %v788
    %v791 = vmul.f32 %v789, %v789
    %v792 = vmul.f32 %v790, %v790
    %v793 = vsel %vm28, %v791, 0.0
    %794 = vadd.xlane.f32.xlu0 %v793
    %v795 = vpop.xlane.xlu0 %794
    %v796 = vsel %vm28, %v792, 0.0
    %797 = vadd.xlane.f32.xlu0 %v796
    %v798 = vpop.xlane.xlu0 %797
    %v799 = vmul.f32 %v795, %v41
    %v800 = vmul.f32 %v798, %v41
    %v801 = vadd.f32 %v799, 1e-12
    %v802 = vadd.f32 %v800, 1e-12
    %v803 = vrsqrt.pop %v801
    %v804 = vmul.f32 %v803, %v801
    %v805 = vmul.f32 %v804, %v803
    %v806 = vmul.f32 0.5, %v805
    %v807 = vsub.f32 1.5, %v806
    %v808 = vmul.f32 %v803, %v807
    %vm809 = vweird.f32 %v801
    %vm810 = vweird.f32 %v803
    %vm811 = vmor %vm809, %vm810
    %v812 = vsel %vm811, %v803, %v808
    %v813 = vrsqrt.pop %v802
    %v814 = vmul.f32 %v813, %v802
    %v815 = vmul.f32 %v814, %v813
    %v816 = vmul.f32 0.5, %v815
    %v817 = vsub.f32 1.5, %v816
    %v818 = vmul.f32 %v813, %v817
    %vm819 = vweird.f32 %v802
    %vm820 = vweird.f32 %v813
    %vm821 = vmor %vm819, %vm820
    %v822 = vsel %vm821, %v813, %v818
    %v823 = vmul.f32 %v789, %v812
    %v824 = vmul.f32 %v790, %v822
    %v825 = vperm.slane %v22, 6
    %v826 = vmul.f32 %v823, %v825
    %v827 = vmul.f32 %v824, %v825
    %v828 = vperm.slane %v22, 7
    %v829 = vadd.f32 %v826, %v828
    %v830 = vadd.f32 %v827, %v828
    %s831 = scalar_lea.vmem %s1, 64
    %v832 = vld [vmem:[%s831] sm:$0xff]
    %v833 = vld [vmem:[%s831 + $0x8] sm:$0xff]
    %v834 = vld [vmem:[%s831 + $0x10] sm:$0xff]
    %v835 = vld [vmem:[%s831 + $0x18] sm:$0xff]
    %v836 = vld [vmem:[%s831 + $0x20] sm:$0xff]
    %v837 = vld [vmem:[%s831 + $0x28] sm:$0xff]
    %v838 = vld [vmem:[%s831 + $0x30] sm:$0xff]
    %v839 = vld [vmem:[%s831 + $0x38] sm:$0xff]
    %v840 = vpack.c.bf16 %v830, %v829
    %v841 = vperm.slane %v24, 1
    %v846 = vunpack.c.l.b16 %v832
    %v847 = vunpack.c.l.b16 %v834
    %v848 = vunpack.c.l.b16 %v836
    %v849 = vunpack.c.l.b16 %v838
    %v850 = vpack.c.b16 %v847, %v846
    %v851 = vpack.c.b16 %v849, %v848
    %v855 = vsel %vm28, %v840, 0
    %857 = vmatpush.bf16.msra.mxu0 0
    %858 = vmatpush.bf16.msra.mxu0 0
    %859 = vmatpush.bf16.msra.mxu0 0
    %860 = vmatpush.bf16.msra.mxu0 0
    %861 = vmatpush.bf16.msra.mxu0 0
    %862 = vmatpush.bf16.msra.mxu0 0
    %863 = vmatpush.bf16.msra.mxu0 %v851
    %864 = vmatpush.bf16.msra.mxu0 %v850
    %865 = vmatmul.bf16.gmra.mxu0 %v855
    %v866 = vpop.f32.mrf.mxu0
    %v867 = vadd.f32 %v841, %v866
    %v868 = vpop.f32.mrf.mxu0
    %v869 = vadd.f32 %v841, %v868
    %870 = vdwg.mxu0
    %v871 = vpack.c.bf16 %v867, %v867
    %v872 = vpack.c.bf16 %v869, %v869
    %v874 = vunpack.c.l.b16 %v871
    %v875 = vpack.c.b16 %v874, %v874
    %876 = vrot.lane.b32.xlu0 %v875, 96
    %v877 = vpop.permute.xlu0 %876
    %v879 = vsel %vm132, %v871, 0
    %v882 = vsel %vm132, %v877, 0
    %884 = vmatpush.bf16.xpose.msra.mxu0 0
    %885 = vmatpush.bf16.xpose.msra.mxu0 0
    %886 = vmatpush.bf16.xpose.msra.mxu0 0
    %887 = vmatpush.bf16.xpose.msra.mxu0 0
    %888 = vmatpush.bf16.xpose.msra.mxu0 0
    %889 = vmatpush.bf16.xpose.msra.mxu0 0
    %890 = vmatpush.bf16.xpose.msra.mxu0 0
    %891 = vmatpush.bf16.xpose.msra.mxu0 %v882
    %892 = vmatmul.bf16.gmra.mxu0 %v879
    %v893 = vpop.f32.mrf.mxu0
    %v894 = vadd.f32 0.0, %v893
    %v895 = vpop.f32.mrf.mxu0
    %896 = vdwg.mxu0
    %v898 = vunpack.c.l.b16 %v872
    %v899 = vpack.c.b16 %v898, %v898
    %900 = vrot.lane.b32.xlu0 %v899, 96
    %v901 = vpop.permute.xlu0 %900
    %v903 = vsel %vm132, %v872, 0
    %v906 = vsel %vm132, %v901, 0
    %908 = vmatpush.bf16.xpose.msra.mxu0 0
    %909 = vmatpush.bf16.xpose.msra.mxu0 0
    %910 = vmatpush.bf16.xpose.msra.mxu0 0
    %911 = vmatpush.bf16.xpose.msra.mxu0 0
    %912 = vmatpush.bf16.xpose.msra.mxu0 0
    %913 = vmatpush.bf16.xpose.msra.mxu0 0
    %914 = vmatpush.bf16.xpose.msra.mxu0 0
    %915 = vmatpush.bf16.xpose.msra.mxu0 %v906
    %916 = vmatmul.bf16.gmra.mxu0 %v903
    %v917 = vpop.f32.mrf.mxu0
    %v918 = vadd.f32 0.0, %v917
    %v919 = vpop.f32.mrf.mxu0
    %920 = vdwg.mxu0
    %v921 = vmul.f32 %v894, 0.35355338
    %v922 = vmul.f32 %v918, 0.35355338
    %v923 = vsel %vm132, %v921, -inf
    %924 = vmax.xlane.f32.xlu0 %v923
    %v925 = vpop.xlane.xlu0 %924
    %v926 = vsel %vm132, %v922, -inf
    %927 = vmax.xlane.f32.xlu0 %v926
    %v928 = vpop.xlane.xlu0 %927
    %v929 = vsub.f32 %v921, %v925
    %v930 = vsub.f32 %v922, %v928
    %v931 = vmul.f32 %v929, 1.442695
    %v932 = vpow.pop %v931
    %v933 = vmul.f32 %v930, 1.442695
    %v934 = vpow.pop %v933
    %v935 = vsel %vm132, %v932, 0.0
    %936 = vadd.xlane.f32.xlu0 %v935
    %v937 = vpop.xlane.xlu0 %936
    %v938 = vsel %vm132, %v934, 0.0
    %939 = vadd.xlane.f32.xlu0 %v938
    %v940 = vpop.xlane.xlu0 %939
    %v941 = vrcp.pop %v937
    %v942 = vrcp.pop %v940
    %v943 = vmul.f32 %v932, %v941
    %v944 = vmul.f32 %v934, %v942
    %v945 = vpack.c.bf16 %v943, %v943
    %v946 = vpack.c.bf16 %v944, %v944
    %947 = vrot.lane.b32.xlu0 %v875, 64
    %v948 = vpop.permute.xlu0 %947
    %v950 = vsel %vm132, %v945, 0
    %v953 = vsel %vm207, %v948, 0
    %955 = vmatpush.bf16.msra.mxu0 0
    %956 = vmatpush.bf16.msra.mxu0 0
    %957 = vmatpush.bf16.msra.mxu0 0
    %958 = vmatpush.bf16.msra.mxu0 0
    %959 = vmatpush.bf16.msra.mxu0 0
    %960 = vmatpush.bf16.msra.mxu0 0
    %961 = vmatpush.bf16.msra.mxu0 0
    %962 = vmatpush.bf16.msra.mxu0 %v953
    %963 = vmatmul.bf16.gmra.mxu0 %v950
    %v964 = vpop.f32.mrf.mxu0
    %v965 = vadd.f32 0.0, %v964
    %v966 = vpop.f32.mrf.mxu0
    %967 = vdwg.mxu0
    %968 = vrot.lane.b32.xlu0 %v899, 64
    %v969 = vpop.permute.xlu0 %968
    %v971 = vsel %vm132, %v946, 0
    %v974 = vsel %vm207, %v969, 0
    %976 = vmatpush.bf16.msra.mxu0 0
    %977 = vmatpush.bf16.msra.mxu0 0
    %978 = vmatpush.bf16.msra.mxu0 0
    %979 = vmatpush.bf16.msra.mxu0 0
    %980 = vmatpush.bf16.msra.mxu0 0
    %981 = vmatpush.bf16.msra.mxu0 0
    %982 = vmatpush.bf16.msra.mxu0 0
    %983 = vmatpush.bf16.msra.mxu0 %v974
    %984 = vmatmul.bf16.gmra.mxu0 %v971
    %v985 = vpop.f32.mrf.mxu0
    %v986 = vadd.f32 0.0, %v985
    %v987 = vpop.f32.mrf.mxu0
    %988 = vdwg.mxu0
    %989 = vrot.lane.b32.xlu0 %v875, 120
    %v990 = vpop.permute.xlu0 %989
    %991 = vrot.lane.b32.xlu0 %v875, 88
    %v992 = vpop.permute.xlu0 %991
    %v994 = vsel %vm132, %v990, 0
    %v997 = vsel %vm132, %v992, 0
    %999 = vmatpush.bf16.xpose.msra.mxu0 0
    %1000 = vmatpush.bf16.xpose.msra.mxu0 0
    %1001 = vmatpush.bf16.xpose.msra.mxu0 0
    %1002 = vmatpush.bf16.xpose.msra.mxu0 0
    %1003 = vmatpush.bf16.xpose.msra.mxu0 0
    %1004 = vmatpush.bf16.xpose.msra.mxu0 0
    %1005 = vmatpush.bf16.xpose.msra.mxu0 0
    %1006 = vmatpush.bf16.xpose.msra.mxu0 %v997
    %1007 = vmatmul.bf16.gmra.mxu0 %v994
    %v1008 = vpop.f32.mrf.mxu0
    %v1009 = vadd.f32 0.0, %v1008
    %v1010 = vpop.f32.mrf.mxu0
    %1011 = vdwg.mxu0
    %1012 = vrot.lane.b32.xlu0 %v899, 120
    %v1013 = vpop.permute.xlu0 %1012
    %1014 = vrot.lane.b32.xlu0 %v899, 88
    %v1015 = vpop.permute.xlu0 %1014
    %v1017 = vsel %vm132, %v1013, 0
    %v1020 = vsel %vm132, %v1015, 0
    %1022 = vmatpush.bf16.xpose.msra.mxu0 0
    %1023 = vmatpush.bf16.xpose.msra.mxu0 0
    %1024 = vmatpush.bf16.xpose.msra.mxu0 0
    %1025 = vmatpush.bf16.xpose.msra.mxu0 0
    %1026 = vmatpush.bf16.xpose.msra.mxu0 0
    %1027 = vmatpush.bf16.xpose.msra.mxu0 0
    %1028 = vmatpush.bf16.xpose.msra.mxu0 0
    %1029 = vmatpush.bf16.xpose.msra.mxu0 %v1020
    %1030 = vmatmul.bf16.gmra.mxu0 %v1017
    %v1031 = vpop.f32.mrf.mxu0
    %v1032 = vadd.f32 0.0, %v1031
    %v1033 = vpop.f32.mrf.mxu0
    %1034 = vdwg.mxu0
    %v1035 = vmul.f32 %v1009, 0.35355338
    %v1036 = vmul.f32 %v1032, 0.35355338
    %v1037 = vsel %vm132, %v1035, -inf
    %1038 = vmax.xlane.f32.xlu0 %v1037
    %v1039 = vpop.xlane.xlu0 %1038
    %v1040 = vsel %vm132, %v1036, -inf
    %1041 = vmax.xlane.f32.xlu0 %v1040
    %v1042 = vpop.xlane.xlu0 %1041
    %v1043 = vsub.f32 %v1035, %v1039
    %v1044 = vsub.f32 %v1036, %v1042
    %v1045 = vmul.f32 %v1043, 1.442695
    %v1046 = vpow.pop %v1045
    %v1047 = vmul.f32 %v1044, 1.442695
    %v1048 = vpow.pop %v1047
    %v1049 = vsel %vm132, %v1046, 0.0
    %1050 = vadd.xlane.f32.xlu0 %v1049
    %v1051 = vpop.xlane.xlu0 %1050
    %v1052 = vsel %vm132, %v1048, 0.0
    %1053 = vadd.xlane.f32.xlu0 %v1052
    %v1054 = vpop.xlane.xlu0 %1053
    %v1055 = vrcp.pop %v1051
    %v1056 = vrcp.pop %v1054
    %v1057 = vmul.f32 %v1046, %v1055
    %v1058 = vmul.f32 %v1048, %v1056
    %v1059 = vpack.c.bf16 %v1057, %v1057
    %v1060 = vpack.c.bf16 %v1058, %v1058
    %1061 = vrot.lane.b32.xlu0 %v875, 56
    %v1062 = vpop.permute.xlu0 %1061
    %v1064 = vsel %vm132, %v1059, 0
    %v1067 = vsel %vm207, %v1062, 0
    %1069 = vmatpush.bf16.msra.mxu0 0
    %1070 = vmatpush.bf16.msra.mxu0 0
    %1071 = vmatpush.bf16.msra.mxu0 0
    %1072 = vmatpush.bf16.msra.mxu0 0
    %1073 = vmatpush.bf16.msra.mxu0 0
    %1074 = vmatpush.bf16.msra.mxu0 0
    %1075 = vmatpush.bf16.msra.mxu0 0
    %1076 = vmatpush.bf16.msra.mxu0 %v1067
    %1077 = vmatmul.bf16.gmra.mxu0 %v1064
    %v1078 = vpop.f32.mrf.mxu0
    %v1079 = vadd.f32 0.0, %v1078
    %v1080 = vpop.f32.mrf.mxu0
    %1081 = vdwg.mxu0
    %1082 = vrot.lane.b32.xlu0 %v899, 56
    %v1083 = vpop.permute.xlu0 %1082
    %v1085 = vsel %vm132, %v1060, 0
    %v1088 = vsel %vm207, %v1083, 0
    %1090 = vmatpush.bf16.msra.mxu0 0
    %1091 = vmatpush.bf16.msra.mxu0 0
    %1092 = vmatpush.bf16.msra.mxu0 0
    %1093 = vmatpush.bf16.msra.mxu0 0
    %1094 = vmatpush.bf16.msra.mxu0 0
    %1095 = vmatpush.bf16.msra.mxu0 0
    %1096 = vmatpush.bf16.msra.mxu0 0
    %1097 = vmatpush.bf16.msra.mxu0 %v1088
    %1098 = vmatmul.bf16.gmra.mxu0 %v1085
    %v1099 = vpop.f32.mrf.mxu0
    %v1100 = vadd.f32 0.0, %v1099
    %v1101 = vpop.f32.mrf.mxu0
    %1102 = vdwg.mxu0
    %1103 = vrot.lane.b32.xlu0 %v875, 112
    %v1104 = vpop.permute.xlu0 %1103
    %1105 = vrot.lane.b32.xlu0 %v875, 80
    %v1106 = vpop.permute.xlu0 %1105
    %v1108 = vsel %vm132, %v1104, 0
    %v1111 = vsel %vm132, %v1106, 0
    %1113 = vmatpush.bf16.xpose.msra.mxu0 0
    %1114 = vmatpush.bf16.xpose.msra.mxu0 0
    %1115 = vmatpush.bf16.xpose.msra.mxu0 0
    %1116 = vmatpush.bf16.xpose.msra.mxu0 0
    %1117 = vmatpush.bf16.xpose.msra.mxu0 0
    %1118 = vmatpush.bf16.xpose.msra.mxu0 0
    %1119 = vmatpush.bf16.xpose.msra.mxu0 0
    %1120 = vmatpush.bf16.xpose.msra.mxu0 %v1111
    %1121 = vmatmul.bf16.gmra.mxu0 %v1108
    %v1122 = vpop.f32.mrf.mxu0
    %v1123 = vadd.f32 0.0, %v1122
    %v1124 = vpop.f32.mrf.mxu0
    %1125 = vdwg.mxu0
    %1126 = vrot.lane.b32.xlu0 %v899, 112
    %v1127 = vpop.permute.xlu0 %1126
    %1128 = vrot.lane.b32.xlu0 %v899, 80
    %v1129 = vpop.permute.xlu0 %1128
    %v1131 = vsel %vm132, %v1127, 0
    %v1134 = vsel %vm132, %v1129, 0
    %1136 = vmatpush.bf16.xpose.msra.mxu0 0
    %1137 = vmatpush.bf16.xpose.msra.mxu0 0
    %1138 = vmatpush.bf16.xpose.msra.mxu0 0
    %1139 = vmatpush.bf16.xpose.msra.mxu0 0
    %1140 = vmatpush.bf16.xpose.msra.mxu0 0
    %1141 = vmatpush.bf16.xpose.msra.mxu0 0
    %1142 = vmatpush.bf16.xpose.msra.mxu0 0
    %1143 = vmatpush.bf16.xpose.msra.mxu0 %v1134
    %1144 = vmatmul.bf16.gmra.mxu0 %v1131
    %v1145 = vpop.f32.mrf.mxu0
    %v1146 = vadd.f32 0.0, %v1145
    %v1147 = vpop.f32.mrf.mxu0
    %1148 = vdwg.mxu0
    %v1149 = vmul.f32 %v1123, 0.35355338
    %v1150 = vmul.f32 %v1146, 0.35355338
    %v1151 = vsel %vm132, %v1149, -inf
    %1152 = vmax.xlane.f32.xlu0 %v1151
    %v1153 = vpop.xlane.xlu0 %1152
    %v1154 = vsel %vm132, %v1150, -inf
    %1155 = vmax.xlane.f32.xlu0 %v1154
    %v1156 = vpop.xlane.xlu0 %1155
    %v1157 = vsub.f32 %v1149, %v1153
    %v1158 = vsub.f32 %v1150, %v1156
    %v1159 = vmul.f32 %v1157, 1.442695
    %v1160 = vpow.pop %v1159
    %v1161 = vmul.f32 %v1158, 1.442695
    %v1162 = vpow.pop %v1161
    %v1163 = vsel %vm132, %v1160, 0.0
    %1164 = vadd.xlane.f32.xlu0 %v1163
    %v1165 = vpop.xlane.xlu0 %1164
    %v1166 = vsel %vm132, %v1162, 0.0
    %1167 = vadd.xlane.f32.xlu0 %v1166
    %v1168 = vpop.xlane.xlu0 %1167
    %v1169 = vrcp.pop %v1165
    %v1170 = vrcp.pop %v1168
    %v1171 = vmul.f32 %v1160, %v1169
    %v1172 = vmul.f32 %v1162, %v1170
    %v1173 = vpack.c.bf16 %v1171, %v1171
    %v1174 = vpack.c.bf16 %v1172, %v1172
    %1175 = vrot.lane.b32.xlu0 %v875, 48
    %v1176 = vpop.permute.xlu0 %1175
    %v1178 = vsel %vm132, %v1173, 0
    %v1181 = vsel %vm207, %v1176, 0
    %1183 = vmatpush.bf16.msra.mxu0 0
    %1184 = vmatpush.bf16.msra.mxu0 0
    %1185 = vmatpush.bf16.msra.mxu0 0
    %1186 = vmatpush.bf16.msra.mxu0 0
    %1187 = vmatpush.bf16.msra.mxu0 0
    %1188 = vmatpush.bf16.msra.mxu0 0
    %1189 = vmatpush.bf16.msra.mxu0 0
    %1190 = vmatpush.bf16.msra.mxu0 %v1181
    %1191 = vmatmul.bf16.gmra.mxu0 %v1178
    %v1192 = vpop.f32.mrf.mxu0
    %v1193 = vadd.f32 0.0, %v1192
    %v1194 = vpop.f32.mrf.mxu0
    %1195 = vdwg.mxu0
    %1196 = vrot.lane.b32.xlu0 %v899, 48
    %v1197 = vpop.permute.xlu0 %1196
    %v1199 = vsel %vm132, %v1174, 0
    %v1202 = vsel %vm207, %v1197, 0
    %1204 = vmatpush.bf16.msra.mxu0 0
    %1205 = vmatpush.bf16.msra.mxu0 0
    %1206 = vmatpush.bf16.msra.mxu0 0
    %1207 = vmatpush.bf16.msra.mxu0 0
    %1208 = vmatpush.bf16.msra.mxu0 0
    %1209 = vmatpush.bf16.msra.mxu0 0
    %1210 = vmatpush.bf16.msra.mxu0 0
    %1211 = vmatpush.bf16.msra.mxu0 %v1202
    %1212 = vmatmul.bf16.gmra.mxu0 %v1199
    %v1213 = vpop.f32.mrf.mxu0
    %v1214 = vadd.f32 0.0, %v1213
    %v1215 = vpop.f32.mrf.mxu0
    %1216 = vdwg.mxu0
    %1217 = vrot.lane.b32.xlu0 %v875, 104
    %v1218 = vpop.permute.xlu0 %1217
    %1219 = vrot.lane.b32.xlu0 %v875, 72
    %v1220 = vpop.permute.xlu0 %1219
    %v1222 = vsel %vm132, %v1218, 0
    %v1225 = vsel %vm132, %v1220, 0
    %1227 = vmatpush.bf16.xpose.msra.mxu0 0
    %1228 = vmatpush.bf16.xpose.msra.mxu0 0
    %1229 = vmatpush.bf16.xpose.msra.mxu0 0
    %1230 = vmatpush.bf16.xpose.msra.mxu0 0
    %1231 = vmatpush.bf16.xpose.msra.mxu0 0
    %1232 = vmatpush.bf16.xpose.msra.mxu0 0
    %1233 = vmatpush.bf16.xpose.msra.mxu0 0
    %1234 = vmatpush.bf16.xpose.msra.mxu0 %v1225
    %1235 = vmatmul.bf16.gmra.mxu0 %v1222
    %v1236 = vpop.f32.mrf.mxu0
    %v1237 = vadd.f32 0.0, %v1236
    %v1238 = vpop.f32.mrf.mxu0
    %1239 = vdwg.mxu0
    %1240 = vrot.lane.b32.xlu0 %v899, 104
    %v1241 = vpop.permute.xlu0 %1240
    %1242 = vrot.lane.b32.xlu0 %v899, 72
    %v1243 = vpop.permute.xlu0 %1242
    %v1245 = vsel %vm132, %v1241, 0
    %v1248 = vsel %vm132, %v1243, 0
    %1250 = vmatpush.bf16.xpose.msra.mxu0 0
    %1251 = vmatpush.bf16.xpose.msra.mxu0 0
    %1252 = vmatpush.bf16.xpose.msra.mxu0 0
    %1253 = vmatpush.bf16.xpose.msra.mxu0 0
    %1254 = vmatpush.bf16.xpose.msra.mxu0 0
    %1255 = vmatpush.bf16.xpose.msra.mxu0 0
    %1256 = vmatpush.bf16.xpose.msra.mxu0 0
    %1257 = vmatpush.bf16.xpose.msra.mxu0 %v1248
    %1258 = vmatmul.bf16.gmra.mxu0 %v1245
    %v1259 = vpop.f32.mrf.mxu0
    %v1260 = vadd.f32 0.0, %v1259
    %v1261 = vpop.f32.mrf.mxu0
    %1262 = vdwg.mxu0
    %v1263 = vmul.f32 %v1237, 0.35355338
    %v1264 = vmul.f32 %v1260, 0.35355338
    %v1265 = vsel %vm132, %v1263, -inf
    %1266 = vmax.xlane.f32.xlu0 %v1265
    %v1267 = vpop.xlane.xlu0 %1266
    %v1268 = vsel %vm132, %v1264, -inf
    %1269 = vmax.xlane.f32.xlu0 %v1268
    %v1270 = vpop.xlane.xlu0 %1269
    %v1271 = vsub.f32 %v1263, %v1267
    %v1272 = vsub.f32 %v1264, %v1270
    %v1273 = vmul.f32 %v1271, 1.442695
    %v1274 = vpow.pop %v1273
    %v1275 = vmul.f32 %v1272, 1.442695
    %v1276 = vpow.pop %v1275
    %v1277 = vsel %vm132, %v1274, 0.0
    %1278 = vadd.xlane.f32.xlu0 %v1277
    %v1279 = vpop.xlane.xlu0 %1278
    %v1280 = vsel %vm132, %v1276, 0.0
    %1281 = vadd.xlane.f32.xlu0 %v1280
    %v1282 = vpop.xlane.xlu0 %1281
    %v1283 = vrcp.pop %v1279
    %v1284 = vrcp.pop %v1282
    %v1285 = vmul.f32 %v1274, %v1283
    %v1286 = vmul.f32 %v1276, %v1284
    %v1287 = vpack.c.bf16 %v1285, %v1285
    %v1288 = vpack.c.bf16 %v1286, %v1286
    %1289 = vrot.lane.b32.xlu0 %v875, 40
    %v1290 = vpop.permute.xlu0 %1289
    %v1292 = vsel %vm132, %v1287, 0
    %v1295 = vsel %vm207, %v1290, 0
    %1297 = vmatpush.bf16.msra.mxu0 0
    %1298 = vmatpush.bf16.msra.mxu0 0
    %1299 = vmatpush.bf16.msra.mxu0 0
    %1300 = vmatpush.bf16.msra.mxu0 0
    %1301 = vmatpush.bf16.msra.mxu0 0
    %1302 = vmatpush.bf16.msra.mxu0 0
    %1303 = vmatpush.bf16.msra.mxu0 0
    %1304 = vmatpush.bf16.msra.mxu0 %v1295
    %1305 = vmatmul.bf16.gmra.mxu0 %v1292
    %v1306 = vpop.f32.mrf.mxu0
    %v1307 = vadd.f32 0.0, %v1306
    %v1308 = vpop.f32.mrf.mxu0
    %1309 = vdwg.mxu0
    %1310 = vrot.lane.b32.xlu0 %v899, 40
    %v1311 = vpop.permute.xlu0 %1310
    %v1313 = vsel %vm132, %v1288, 0
    %v1316 = vsel %vm207, %v1311, 0
    %1318 = vmatpush.bf16.msra.mxu0 0
    %1319 = vmatpush.bf16.msra.mxu0 0
    %1320 = vmatpush.bf16.msra.mxu0 0
    %1321 = vmatpush.bf16.msra.mxu0 0
    %1322 = vmatpush.bf16.msra.mxu0 0
    %1323 = vmatpush.bf16.msra.mxu0 0
    %1324 = vmatpush.bf16.msra.mxu0 0
    %1325 = vmatpush.bf16.msra.mxu0 %v1316
    %1326 = vmatmul.bf16.gmra.mxu0 %v1313
    %v1327 = vpop.f32.mrf.mxu0
    %v1328 = vadd.f32 0.0, %v1327
    %v1329 = vpop.f32.mrf.mxu0
    %1330 = vdwg.mxu0
    %1333 = vrot.lane.b32.xlu0 %v1079, 8
    %v1334 = vpop.permute.xlu0 %1333
    %1335 = vrot.lane.b32.xlu0 %v1100, 8
    %v1336 = vpop.permute.xlu0 %1335
    %1341 = vrot.lane.b32.xlu0 %v1193, 16
    %v1342 = vpop.permute.xlu0 %1341
    %1343 = vrot.lane.b32.xlu0 %v1214, 16
    %v1344 = vpop.permute.xlu0 %1343
    %1349 = vrot.lane.b32.xlu0 %v1307, 24
    %v1350 = vpop.permute.xlu0 %1349
    %1351 = vrot.lane.b32.xlu0 %v1328, 24
    %v1352 = vpop.permute.xlu0 %1351
    %v1355 = vsel %vm132, %v965, %v1334
    %v1356 = vsel %vm132, %v986, %v1336
    %v1357 = vsel %vm613, %v1355, %v1342
    %v1358 = vsel %vm613, %v1356, %v1344
    %v1359 = vsel %vm616, %v1357, %v1350
    %v1360 = vsel %vm616, %v1358, %v1352
    %v1361 = vpack.c.bf16 %v1360, %v1359
    %v1362 = vperm.slane %v23, 0
    %v1363 = vunpack.c.h.b16 %v832
    %v1364 = vunpack.c.h.b16 %v834
    %v1365 = vunpack.c.h.b16 %v836
    %v1366 = vunpack.c.h.b16 %v838
    %v1367 = vpack.c.b16 %v1364, %v1363
    %v1368 = vpack.c.b16 %v1366, %v1365
    %v1372 = vsel %vm28, %v1361, 0
    %1374 = vmatpush.bf16.msra.mxu0 0
    %1375 = vmatpush.bf16.msra.mxu0 0
    %1376 = vmatpush.bf16.msra.mxu0 0
    %1377 = vmatpush.bf16.msra.mxu0 0
    %1378 = vmatpush.bf16.msra.mxu0 0
    %1379 = vmatpush.bf16.msra.mxu0 0
    %1380 = vmatpush.bf16.msra.mxu0 %v1368
    %1381 = vmatpush.bf16.msra.mxu0 %v1367
    %1382 = vmatmul.bf16.gmra.mxu0 %v1372
    %v1383 = vpop.f32.mrf.mxu0
    %v1384 = vadd.f32 %v1362, %v1383
    %v1385 = vpop.f32.mrf.mxu0
    %v1386 = vadd.f32 %v1362, %v1385
    %1387 = vdwg.mxu0
    %v1388 = vadd.f32 %v1384, %v829
    %v1389 = vadd.f32 %v1386, %v830
    %v1390 = vsel %vm28, %v1388, 0.0
    %1391 = vadd.xlane.f32.xlu0 %v1390
    %v1392 = vpop.xlane.xlu0 %1391
    %v1393 = vsel %vm28, %v1389, 0.0
    %1394 = vadd.xlane.f32.xlu0 %v1393
    %v1395 = vpop.xlane.xlu0 %1394
    %v1396 = vmul.f32 %v1392, %v41
    %v1397 = vmul.f32 %v1395, %v41
    %v1398 = vsub.f32 %v1388, %v1396
    %v1399 = vsub.f32 %v1389, %v1397
    %v1400 = vmul.f32 %v1398, %v1398
    %v1401 = vmul.f32 %v1399, %v1399
    %v1402 = vsel %vm28, %v1400, 0.0
    %1403 = vadd.xlane.f32.xlu0 %v1402
    %v1404 = vpop.xlane.xlu0 %1403
    %v1405 = vsel %vm28, %v1401, 0.0
    %1406 = vadd.xlane.f32.xlu0 %v1405
    %v1407 = vpop.xlane.xlu0 %1406
    %v1408 = vmul.f32 %v1404, %v41
    %v1409 = vmul.f32 %v1407, %v41
    %v1410 = vadd.f32 %v1408, 1e-12
    %v1411 = vadd.f32 %v1409, 1e-12
    %v1412 = vrsqrt.pop %v1410
    %v1413 = vmul.f32 %v1412, %v1410
    %v1414 = vmul.f32 %v1413, %v1412
    %v1415 = vmul.f32 0.5, %v1414
    %v1416 = vsub.f32 1.5, %v1415
    %v1417 = vmul.f32 %v1412, %v1416
    %vm1418 = vweird.f32 %v1410
    %vm1419 = vweird.f32 %v1412
    %vm1420 = vmor %vm1418, %vm1419
    %v1421 = vsel %vm1420, %v1412, %v1417
    %v1422 = vrsqrt.pop %v1411
    %v1423 = vmul.f32 %v1422, %v1411
    %v1424 = vmul.f32 %v1423, %v1422
    %v1425 = vmul.f32 0.5, %v1424
    %v1426 = vsub.f32 1.5, %v1425
    %v1427 = vmul.f32 %v1422, %v1426
    %vm1428 = vweird.f32 %v1411
    %vm1429 = vweird.f32 %v1422
    %vm1430 = vmor %vm1428, %vm1429
    %v1431 = vsel %vm1430, %v1422, %v1427
    %v1432 = vmul.f32 %v1398, %v1421
    %v1433 = vmul.f32 %v1399, %v1431
    %v1434 = vperm.slane %v23, 1
    %v1435 = vmul.f32 %v1432, %v1434
    %v1436 = vmul.f32 %v1433, %v1434
    %v1437 = vperm.slane %v23, 2
    %v1438 = vadd.f32 %v1435, %v1437
    %v1439 = vadd.f32 %v1436, %v1437
    %v1440 = vpack.c.bf16 %v1439, %v1438
    %v1441 = vperm.slane %v25, 1
    %v1446 = vunpack.c.l.b16 %v833
    %v1447 = vunpack.c.l.b16 %v835
    %v1448 = vunpack.c.l.b16 %v837
    %v1449 = vunpack.c.l.b16 %v839
    %v1450 = vpack.c.b16 %v1447, %v1446
    %v1451 = vpack.c.b16 %v1449, %v1448
    %v1455 = vsel %vm28, %v1440, 0
    %1457 = vmatpush.bf16.msra.mxu0 0
    %1458 = vmatpush.bf16.msra.mxu0 0
    %1459 = vmatpush.bf16.msra.mxu0 0
    %1460 = vmatpush.bf16.msra.mxu0 0
    %1461 = vmatpush.bf16.msra.mxu0 0
    %1462 = vmatpush.bf16.msra.mxu0 0
    %1463 = vmatpush.bf16.msra.mxu0 %v1451
    %1464 = vmatpush.bf16.msra.mxu0 %v1450
    %1465 = vmatmul.bf16.gmra.mxu0 %v1455
    %v1466 = vpop.f32.mrf.mxu0
    %v1467 = vadd.f32 %v1441, %v1466
    %v1468 = vpop.f32.mrf.mxu0
    %v1469 = vadd.f32 %v1441, %v1468
    %1470 = vdwg.mxu0
    %v1471 = vmul.f32 %v1467, %v1467
    %v1472 = vmul.f32 %v1469, %v1469
    %v1473 = vmul.f32 %v1467, %v1471
    %v1474 = vmul.f32 %v1469, %v1472
    %v1475 = vmul.f32 %v1473, 0.044715
    %v1476 = vmul.f32 %v1474, 0.044715
    %v1477 = vadd.f32 %v1467, %v1475
    %v1478 = vadd.f32 %v1469, %v1476
    %v1479 = vmul.f32 %v1477, 0.7978846
    %v1480 = vmul.f32 %v1478, 0.7978846
    %v1481 = vtanh.pop %v1479
    %v1482 = vtanh.pop %v1480
    %v1483 = vadd.f32 %v1481, 1.0
    %v1484 = vadd.f32 %v1482, 1.0
    %v1485 = vmul.f32 %v1483, 0.5
    %v1486 = vmul.f32 %v1484, 0.5
    %v1487 = vmul.f32 %v1467, %v1485
    %v1488 = vmul.f32 %v1469, %v1486
    %v1489 = vpack.c.bf16 %v1488, %v1487
    %v1490 = vperm.slane %v23, 3
    %v1491 = vunpack.c.h.b16 %v833
    %v1492 = vunpack.c.h.b16 %v835
    %v1493 = vunpack.c.h.b16 %v837
    %v1494 = vunpack.c.h.b16 %v839
    %v1495 = vpack.c.b16 %v1492, %v1491
    %v1496 = vpack.c.b16 %v1494, %v1493
    %v1498 = vsel %vm755, %v1489, 0
    %v1501 = vsel %vm755, %v1495, 0
    %v1504 = vsel %vm755, %v1496, 0
    %1506 = vmatpush.bf16.xpose.msra.mxu0 0
    %1507 = vmatpush.bf16.xpose.msra.mxu0 0
    %1508 = vmatpush.bf16.xpose.msra.mxu0 0
    %1509 = vmatpush.bf16.xpose.msra.mxu0 0
    %1510 = vmatpush.bf16.xpose.msra.mxu0 0
    %1511 = vmatpush.bf16.xpose.msra.mxu0 0
    %1512 = vmatpush.bf16.xpose.msra.mxu0 %v1504
    %1513 = vmatpush.bf16.xpose.msra.mxu0 %v1501
    %1514 = vmatmul.bf16.gmra.mxu0 %v1498
    %v1515 = vpop.f32.mrf.mxu0
    %v1516 = vadd.f32 %v1490, %v1515
    %v1517 = vpop.f32.mrf.mxu0
    %v1518 = vadd.f32 %v1490, %v1517
    %1519 = vdwg.mxu0
    %v1520 = vadd.f32 %v1516, %v1438
    %v1521 = vadd.f32 %v1518, %v1439
    %v1522 = vsel %vm28, %v1520, 0.0
    %1523 = vadd.xlane.f32.xlu0 %v1522
    %v1524 = vpop.xlane.xlu0 %1523
    %v1525 = vsel %vm28, %v1521, 0.0
    %1526 = vadd.xlane.f32.xlu0 %v1525
    %v1527 = vpop.xlane.xlu0 %1526
    %v1528 = vmul.f32 %v1524, %v41
    %v1529 = vmul.f32 %v1527, %v41
    %v1530 = vsub.f32 %v1520, %v1528
    %v1531 = vsub.f32 %v1521, %v1529
    %v1532 = vmul.f32 %v1530, %v1530
    %v1533 = vmul.f32 %v1531, %v1531
    %v1534 = vsel %vm28, %v1532, 0.0
    %1535 = vadd.xlane.f32.xlu0 %v1534
    %v1536 = vpop.xlane.xlu0 %1535
    %v1537 = vsel %vm28, %v1533, 0.0
    %1538 = vadd.xlane.f32.xlu0 %v1537
    %v1539 = vpop.xlane.xlu0 %1538
    %v1540 = vmul.f32 %v1536, %v41
    %v1541 = vmul.f32 %v1539, %v41
    %v1542 = vadd.f32 %v1540, 1e-12
    %v1543 = vadd.f32 %v1541, 1e-12
    %v1544 = vrsqrt.pop %v1542
    %v1545 = vmul.f32 %v1544, %v1542
    %v1546 = vmul.f32 %v1545, %v1544
    %v1547 = vmul.f32 0.5, %v1546
    %v1548 = vsub.f32 1.5, %v1547
    %v1549 = vmul.f32 %v1544, %v1548
    %vm1550 = vweird.f32 %v1542
    %vm1551 = vweird.f32 %v1544
    %vm1552 = vmor %vm1550, %vm1551
    %v1553 = vsel %vm1552, %v1544, %v1549
    %v1554 = vrsqrt.pop %v1543
    %v1555 = vmul.f32 %v1554, %v1543
    %v1556 = vmul.f32 %v1555, %v1554
    %v1557 = vmul.f32 0.5, %v1556
    %v1558 = vsub.f32 1.5, %v1557
    %v1559 = vmul.f32 %v1554, %v1558
    %vm1560 = vweird.f32 %v1543
    %vm1561 = vweird.f32 %v1554
    %vm1562 = vmor %vm1560, %vm1561
    %v1563 = vsel %vm1562, %v1554, %v1559
    %v1564 = vmul.f32 %v1530, %v1553
    %v1565 = vmul.f32 %v1531, %v1563
    %v1566 = vperm.slane %v23, 4
    %v1567 = vmul.f32 %v1564, %v1566
    %v1568 = vmul.f32 %v1565, %v1566
    %v1569 = vperm.slane %v23, 5
    %v1570 = vadd.f32 %v1567, %v1569
    %v1571 = vadd.f32 %v1568, %v1569
    %v1573 = vrot.slane %v1571, 7
    %vm1575 = vcmask 1040384
    %v1576 = vsel %vm1575, %v1570, %v1573
    %s1577 = scalar_lea.vmem %s1, 128
    %v1578 = vld [vmem:[%s1577] sm:$0xff]
    %v1579 = vld [vmem:[%s1577 + $0x10] sm:$0xff]
    %v1580 = vld [vmem:[%s1577 + $0x20] sm:$0xff]
    %v1581 = vld [vmem:[%s1577 + $0x30] sm:$0xff]
    %v1582 = vpack.c.bf16 %v1576, %v1576
    %v1583 = vperm.slane %v23, 6
    %v1588 = vunpack.c.l.b16 %v1578
    %v1589 = vunpack.c.l.b16 %v1579
    %v1590 = vunpack.c.l.b16 %v1580
    %v1591 = vunpack.c.l.b16 %v1581
    %v1592 = vpack.c.b16 %v1589, %v1588
    %v1593 = vpack.c.b16 %v1591, %v1590
    %v1597 = vsel %vm28, %v1582, 0
    %1599 = vmatpush.bf16.msra.mxu0 0
    %1600 = vmatpush.bf16.msra.mxu0 0
    %1601 = vmatpush.bf16.msra.mxu0 0
    %1602 = vmatpush.bf16.msra.mxu0 0
    %1603 = vmatpush.bf16.msra.mxu0 0
    %1604 = vmatpush.bf16.msra.mxu0 0
    %1605 = vmatpush.bf16.msra.mxu0 %v1593
    %1606 = vmatpush.bf16.msra.mxu0 %v1592
    %1607 = vmatmul.bf16.gmra.mxu0 %v1597
    %v1608 = vpop.f32.mrf.mxu0
    %v1609 = vadd.f32 %v1583, %v1608
    %v1610 = vpop.f32.mrf.mxu0
    %1611 = vdwg.mxu0
    %v1612 = vtanh.pop %v1609
    %v1613 = vpack.c.bf16 %v1612, %v1612
    %v1614 = vperm.slane %v23, 7
    %v1615 = vunpack.c.h.b16 %v1578
    %v1616 = vunpack.c.h.b16 %v1579
    %v1617 = vunpack.c.h.b16 %v1580
    %v1618 = vunpack.c.h.b16 %v1581
    %v1619 = vpack.c.b16 %v1616, %v1615
    %v1620 = vpack.c.b16 %v1618, %v1617
    %v1624 = vsel %vm28, %v1613, 0
    %1626 = vmatpush.bf16.msra.mxu0 0
    %1627 = vmatpush.bf16.msra.mxu0 0
    %1628 = vmatpush.bf16.msra.mxu0 0
    %1629 = vmatpush.bf16.msra.mxu0 0
    %1630 = vmatpush.bf16.msra.mxu0 0
    %1631 = vmatpush.bf16.msra.mxu0 0
    %1632 = vmatpush.bf16.msra.mxu0 %v1620
    %1633 = vmatpush.bf16.msra.mxu0 %v1619
    %1634 = vmatmul.bf16.gmra.mxu0 %v1624
    %v1635 = vpop.f32.mrf.mxu0
    %v1636 = vadd.f32 %v1614, %v1635
    %v1637 = vpop.f32.mrf.mxu0
    %1638 = vdwg.mxu0
    %vm1639 = vcmask 25600
    %1640 = vst.msk [vmem:[#allocation2] sm:$0x3] %vm1639, %v1636
    // Predicated region
    $region22: #{transformer_model_forward.1} parent=1 // pred_check
      _
    $region23: #{transformer_model_forward.1} parent=1 // pred_check_branch
      %1642 = sbr.rel (0) target = $region25
    $region24: #{transformer_model_forward.1} parent=1 // pred_region
      %1644 = vsyncadd [#allocation3], 0
      %s1646 = sshll.u32 [#allocation2], 4
      %s1647 = int_to_ptr.vmem [resolvable:$true] %s1646
      %s1648 = sshll.u32 %s5, 4
      %s1649 = int_to_ptr.hbm [resolvable:$true] %s1648
      %1651 = dma.vmem_to_hbm [thread:$0]  %s1647, 32, %s1649, [#allocation3]
    $region25: #{transformer_model_forward.1} parent=1 // pred_fallthru
      _
    // Predicated region
    $region26: #{transformer_model_forward.1} parent=1 // pred_check
      _
    $region27: #{transformer_model_forward.1} parent=1 // pred_check_branch
      %1653 = sbr.rel (0) target = $region29
    $region28: #{transformer_model_forward.1} parent=1 // pred_region
      %1655 = dma.done [#allocation3], 32
    $region29: #{transformer_model_forward.1} parent=1 // pred_fallthru
      _
    %1656 = vsyncpa [#allocation3], 1

</llo_original>
